<compile_context>
chip_gen: v5e
topology: v5e:2x2
jax: 0.10.0
libtpu: 0.0.40
codegen_flags: <defaults>
</compile_context>

<pallas_src>
import math

import jax
import jax.numpy as jnp
from jax.experimental import pallas as pl
from jax.experimental.pallas import tpu as pltpu

# ---------------- configuration (small, deterministic) ----------------
D_MODEL = 32
D_FF = 64
SRC_VOCAB = 16
TGT_VOCAB = 16
SRC_LEN = 8
TGT_LEN = 8
BATCH = 2
LN_EPS = 1e-6
NEG_INF = -1e9
ATTN_SCALE = 1.0 / math.sqrt(D_MODEL)


# ---------------- in-kernel helpers ----------------

def _layernorm(z, g, b):
    mu = jnp.mean(z, axis=-1, keepdims=True)
    c = z - mu
    var = jnp.mean(c * c, axis=-1, keepdims=True)
    return c * jax.lax.rsqrt(var + LN_EPS) * g + b


def _attention(q3, k3, v3, mask_add):
    # q3: (B, Lq, D), k3/v3: (B, Lk, D), mask_add: (B, Lq, Lk) additive (0 attend / -1e9 masked)
    # Scale Q (B*Lq*D elems) rather than the score matrix; both tiny, Q is smaller per-row.
    q3 = q3 * ATTN_SCALE
    s = jnp.einsum('bqd,bkd->bqk', q3, k3, preferred_element_type=jnp.float32)
    s = s + mask_add
    s = s - jnp.max(s, axis=-1, keepdims=True)
    p = jnp.exp(s)
    p = p * pl.reciprocal(jnp.sum(p, axis=-1, keepdims=True), approx=True)
    return jnp.einsum('bqk,bkd->bqd', p, v3, preferred_element_type=jnp.float32)


# ---------------- the single fused kernel ----------------

def _encode_decode_kernel(
    xs_ref, xt_ref, enc_m_ref, self_m_ref, cross_m_ref,
    # encoder layer
    e_wqkv_ref, e_bqkv_ref, e_wo_ref, e_bo_ref, e_g1_ref, e_b1_ref,
    e_w1_ref, e_fb1_ref, e_w2_ref, e_fb2_ref, e_g2_ref, e_b2_ref,
    # decoder layer: masked self-attention
    d_wqkv_ref, d_bqkv_ref, d_swo_ref, d_sbo_ref, d_g1_ref, d_b1_ref,
    # decoder layer: cross-attention
    d_cwq_ref, d_cbq_ref, d_cwkv_ref, d_cbkv_ref, d_cwo_ref, d_cbo_ref,
    d_g2_ref, d_b2_ref,
    # decoder layer: FFN
    d_w1_ref, d_fb1_ref, d_w2_ref, d_fb2_ref, d_g3_ref, d_b3_ref,
    o_ref,
):
    B, Ls, Lt, D = BATCH, SRC_LEN, TGT_LEN, D_MODEL

    # ---------- encoder layer (self-attn + FFN, post-LN residuals) ----------
    xs = xs_ref[...]                                                     # (B*Ls, D)
    qkv = jnp.dot(xs, e_wqkv_ref[...], preferred_element_type=jnp.float32) + e_bqkv_ref[...]
    q = qkv[:, 0 * D:1 * D].reshape(B, Ls, D)
    k = qkv[:, 1 * D:2 * D].reshape(B, Ls, D)
    v = qkv[:, 2 * D:3 * D].reshape(B, Ls, D)
    a = _attention(q, k, v, enc_m_ref[...]).reshape(B * Ls, D)
    a = jnp.dot(a, e_wo_ref[...], preferred_element_type=jnp.float32) + e_bo_ref[...]
    h = _layernorm(xs + a, e_g1_ref[...], e_b1_ref[...])
    f = jnp.maximum(jnp.dot(h, e_w1_ref[...], preferred_element_type=jnp.float32)
                    + e_fb1_ref[...], 0.0)
    f = jnp.dot(f, e_w2_ref[...], preferred_element_type=jnp.float32) + e_fb2_ref[...]
    mem = _layernorm(h + f, e_g2_ref[...], e_b2_ref[...])                # (B*Ls, D)

    # ---------- decoder: masked self-attention ----------
    xt = xt_ref[...]                                                     # (B*Lt, D)
    qkv = jnp.dot(xt, d_wqkv_ref[...], preferred_element_type=jnp.float32) + d_bqkv_ref[...]
    q = qkv[:, 0 * D:1 * D].reshape(B, Lt, D)
    k = qkv[:, 1 * D:2 * D].reshape(B, Lt, D)
    v = qkv[:, 2 * D:3 * D].reshape(B, Lt, D)
    a = _attention(q, k, v, self_m_ref[...]).reshape(B * Lt, D)
    a = jnp.dot(a, d_swo_ref[...], preferred_element_type=jnp.float32) + d_sbo_ref[...]
    h1 = _layernorm(xt + a, d_g1_ref[...], d_b1_ref[...])

    # ---------- decoder: cross-attention over encoder memory ----------
    cq = (jnp.dot(h1, d_cwq_ref[...], preferred_element_type=jnp.float32)
          + d_cbq_ref[...]).reshape(B, Lt, D)
    ckv = jnp.dot(mem, d_cwkv_ref[...], preferred_element_type=jnp.float32) + d_cbkv_ref[...]
    ck = ckv[:, 0 * D:1 * D].reshape(B, Ls, D)
    cv = ckv[:, 1 * D:2 * D].reshape(B, Ls, D)
    c = _attention(cq, ck, cv, cross_m_ref[...]).reshape(B * Lt, D)
    c = jnp.dot(c, d_cwo_ref[...], preferred_element_type=jnp.float32) + d_cbo_ref[...]
    h2 = _layernorm(h1 + c, d_g2_ref[...], d_b2_ref[...])

    # ---------- decoder: FFN ----------
    f = jnp.maximum(jnp.dot(h2, d_w1_ref[...], preferred_element_type=jnp.float32)
                    + d_fb1_ref[...], 0.0)
    f = jnp.dot(f, d_w2_ref[...], preferred_element_type=jnp.float32) + d_fb2_ref[...]
    o_ref[...] = _layernorm(h2 + f, d_g3_ref[...], d_b3_ref[...]).astype(o_ref.dtype)


# ---------------- wrapper ----------------

def _vmem():
    return pl.BlockSpec(memory_space=pltpu.MemorySpace.VMEM)


@jax.jit
def encode_decode_forward(params, src, tgt, src_mask, tgt_mask):
    """Mirrors EncodeDecode.forward: decode(encode(src, src_mask), src_mask, tgt, tgt_mask)."""
    B, Ls = src.shape
    Lt = tgt.shape[1]
    D = D_MODEL

    # src_embed / tgt_embed: table lookup (sqrt(D) folded into the table) + precomputed PE.
    xs = (jnp.take(params["src_emb"], src, axis=0) + params["pe_src"][None]).reshape(B * Ls, D)
    xt = (jnp.take(params["tgt_emb"], tgt, axis=0) + params["pe_tgt"][None]).reshape(B * Lt, D)

    # Additive attention masks, built once here (0 = attend, -1e9 = masked).
    enc_m = (1.0 - jnp.broadcast_to(src_mask.astype(jnp.float32), (B, Ls, Ls))) * NEG_INF
    self_m = (1.0 - jnp.broadcast_to(tgt_mask.astype(jnp.float32), (B, Lt, Lt))) * NEG_INF
    cross_m = (1.0 - jnp.broadcast_to(src_mask.astype(jnp.float32), (B, Lt, Ls))) * NEG_INF

    e, d = params["enc"], params["dec"]
    args = (
        xs, xt, enc_m, self_m, cross_m,
        e["wqkv"][0], e["wqkv"][1], e["wo"][0], e["wo"][1], e["ln1"][0], e["ln1"][1],
        e["ffn_w1"][0], e["ffn_w1"][1], e["ffn_w2"][0], e["ffn_w2"][1], e["ln2"][0], e["ln2"][1],
        d["s_wqkv"][0], d["s_wqkv"][1], d["s_wo"][0], d["s_wo"][1], d["ln1"][0], d["ln1"][1],
        d["c_wq"][0], d["c_wq"][1], d["c_wkv"][0], d["c_wkv"][1], d["c_wo"][0], d["c_wo"][1],
        d["ln2"][0], d["ln2"][1],
        d["ffn_w1"][0], d["ffn_w1"][1], d["ffn_w2"][0], d["ffn_w2"][1], d["ln3"][0], d["ln3"][1],
    )

    out = pl.pallas_call(
        _encode_decode_kernel,
        out_shape=jax.ShapeDtypeStruct((B * Lt, D), jnp.float32),
        in_specs=[_vmem()] * len(args),
        out_specs=_vmem(),
    )(*args)
    return out.reshape(B, Lt, D)


# ---------------- params / embeddings (plain JAX, init-time only) ----------------

def positional_encoding(length, d_model):
    pos = jnp.arange(length, dtype=jnp.float32)[:, None]
    i = jnp.arange(0, d_model, 2, dtype=jnp.float32)
    div = jnp.exp(-math.log(10000.0) * i / d_model)
    pe = jnp.zeros((length, d_model), jnp.float32)
    pe = pe.at[:, 0::2].set(jnp.sin(pos * div))
    pe = pe.at[:, 1::2].set(jnp.cos(pos * div))
    return pe


def init_params(key):
    keys = iter(jax.random.split(key, 64))

    def dense(din, dout):
        w = jax.random.normal(next(keys), (din, dout), jnp.float32) / math.sqrt(din)
        return w, jnp.zeros((1, dout), jnp.float32)      # bias kept 2-D for VMEM residency

    def ln():
        return jnp.ones((1, D_MODEL), jnp.float32), jnp.zeros((1, D_MODEL), jnp.float32)

    p = {
        # sqrt(D) embedding scale folded into the tables; PE tables precomputed once.
        "src_emb": jax.random.normal(next(keys), (SRC_VOCAB, D_MODEL), jnp.float32)
                   * 0.02 * math.sqrt(D_MODEL),
        "tgt_emb": jax.random.normal(next(keys), (TGT_VOCAB, D_MODEL), jnp.float32)
                   * 0.02 * math.sqrt(D_MODEL),
        "pe_src": positional_encoding(SRC_LEN, D_MODEL),
        "pe_tgt": positional_encoding(TGT_LEN, D_MODEL),
        "enc": {
            "wqkv": dense(D_MODEL, 3 * D_MODEL),         # fused Wq|Wk|Wv
            "wo": dense(D_MODEL, D_MODEL),
            "ln1": ln(),
            "ffn_w1": dense(D_MODEL, D_FF), "ffn_w2": dense(D_FF, D_MODEL),
            "ln2": ln(),
        },
        "dec": {
            "s_wqkv": dense(D_MODEL, 3 * D_MODEL),       # fused self-attn Wq|Wk|Wv
            "s_wo": dense(D_MODEL, D_MODEL),
            "ln1": ln(),
            "c_wq": dense(D_MODEL, D_MODEL),
            "c_wkv": dense(D_MODEL, 2 * D_MODEL),        # fused cross-attn Wk|Wv
            "c_wo": dense(D_MODEL, D_MODEL),
            "ln2": ln(),
            "ffn_w1": dense(D_MODEL, D_FF), "ffn_w2": dense(D_FF, D_MODEL),
            "ln3": ln(),
        },
        # TODO(synk): generator (final vocab projection + log_softmax) exists in the PyTorch
        # module but is never called inside forward(), so it is not applied here.
    }
    return p


# ---------------- demo ----------------

if __name__ == "__main__":
    key = jax.random.PRNGKey(0)
    pkey, skey, tkey = jax.random.split(key, 3)
    params = init_params(pkey)

    src = jax.random.randint(skey, (BATCH, SRC_LEN), 0, SRC_VOCAB)
    tgt = jax.random.randint(tkey, (BATCH, TGT_LEN), 0, TGT_VOCAB)
    src_mask = jnp.ones((BATCH, 1, SRC_LEN), jnp.float32)                       # no padding
    tgt_mask = jnp.broadcast_to(
        jnp.tril(jnp.ones((TGT_LEN, TGT_LEN), jnp.float32))[None],
        (BATCH, TGT_LEN, TGT_LEN))                                              # causal

    out = encode_decode_forward(params, src, tgt, src_mask, tgt_mask)
    jax.block_until_ready(out)
    assert out.shape == (BATCH, TGT_LEN, D_MODEL) and bool(jnp.all(jnp.isfinite(out)))
    print("KERNEL_OK")
</pallas_src>

<mosaic_0001>
module attributes {stable_mosaic.version = 11 : i64} {
  func.func @_encode_decode_kernel(%arg0: memref<16x32xf32, #tpu.memory_space<vmem>>, %arg1: memref<16x32xf32, #tpu.memory_space<vmem>>, %arg2: memref<2x8x8xf32, #tpu.memory_space<vmem>>, %arg3: memref<2x8x8xf32, #tpu.memory_space<vmem>>, %arg4: memref<2x8x8xf32, #tpu.memory_space<vmem>>, %arg5: memref<32x96xf32, #tpu.memory_space<vmem>>, %arg6: memref<1x96xf32, #tpu.memory_space<vmem>>, %arg7: memref<32x32xf32, #tpu.memory_space<vmem>>, %arg8: memref<1x32xf32, #tpu.memory_space<vmem>>, %arg9: memref<1x32xf32, #tpu.memory_space<vmem>>, %arg10: memref<1x32xf32, #tpu.memory_space<vmem>>, %arg11: memref<32x64xf32, #tpu.memory_space<vmem>>, %arg12: memref<1x64xf32, #tpu.memory_space<vmem>>, %arg13: memref<64x32xf32, #tpu.memory_space<vmem>>, %arg14: memref<1x32xf32, #tpu.memory_space<vmem>>, %arg15: memref<1x32xf32, #tpu.memory_space<vmem>>, %arg16: memref<1x32xf32, #tpu.memory_space<vmem>>, %arg17: memref<32x96xf32, #tpu.memory_space<vmem>>, %arg18: memref<1x96xf32, #tpu.memory_space<vmem>>, %arg19: memref<32x32xf32, #tpu.memory_space<vmem>>, %arg20: memref<1x32xf32, #tpu.memory_space<vmem>>, %arg21: memref<1x32xf32, #tpu.memory_space<vmem>>, %arg22: memref<1x32xf32, #tpu.memory_space<vmem>>, %arg23: memref<32x32xf32, #tpu.memory_space<vmem>>, %arg24: memref<1x32xf32, #tpu.memory_space<vmem>>, %arg25: memref<32x64xf32, #tpu.memory_space<vmem>>, %arg26: memref<1x64xf32, #tpu.memory_space<vmem>>, %arg27: memref<32x32xf32, #tpu.memory_space<vmem>>, %arg28: memref<1x32xf32, #tpu.memory_space<vmem>>, %arg29: memref<1x32xf32, #tpu.memory_space<vmem>>, %arg30: memref<1x32xf32, #tpu.memory_space<vmem>>, %arg31: memref<32x64xf32, #tpu.memory_space<vmem>>, %arg32: memref<1x64xf32, #tpu.memory_space<vmem>>, %arg33: memref<64x32xf32, #tpu.memory_space<vmem>>, %arg34: memref<1x32xf32, #tpu.memory_space<vmem>>, %arg35: memref<1x32xf32, #tpu.memory_space<vmem>>, %arg36: memref<1x32xf32, #tpu.memory_space<vmem>>, %arg37: memref<16x32xf32, #tpu.memory_space<vmem>>) attributes {dimension_semantics = [], scalar_prefetch = 0 : i64, scratch_operands = 0 : i64, tpu.core_type = #tpu.core_type<tc>} {
    %c0 = arith.constant 0 : index
    %c0_0 = arith.constant 0 : index
    %0 = vector.load %arg0[%c0, %c0_0] : memref<16x32xf32, #tpu.memory_space<vmem>>, vector<16x32xf32>
    %c0_1 = arith.constant 0 : index
    %c0_2 = arith.constant 0 : index
    %1 = vector.load %arg5[%c0_1, %c0_2] : memref<32x96xf32, #tpu.memory_space<vmem>>, vector<32x96xf32>
    %cst = arith.constant dense<0.000000e+00> : vector<16x96xf32>
    %2 = tpu.matmul %0, %1, %cst {dimension_numbers = #tpu.dot_dimension_numbers<[1], [0], [0], [1], [0, 0, 1, 1], [], []>} : vector<16x32xf32>, vector<32x96xf32>, vector<16x96xf32> -> vector<16x96xf32>
    %c0_3 = arith.constant 0 : index
    %c0_4 = arith.constant 0 : index
    %3 = vector.load %arg6[%c0_3, %c0_4] : memref<1x96xf32, #tpu.memory_space<vmem>>, vector<1x96xf32>
    %4 = vector.broadcast %3 : vector<1x96xf32> to vector<16x96xf32>
    %5 = arith.addf %2, %4 : vector<16x96xf32>
    %6 = vector.extract_strided_slice %5 {offsets = [0, 0], sizes = [16, 32], strides = [1, 1]} : vector<16x96xf32> to vector<16x32xf32>
    %7 = vector.shape_cast %6 : vector<16x32xf32> to vector<2x8x32xf32>
    %8 = vector.extract_strided_slice %5 {offsets = [0, 32], sizes = [16, 32], strides = [1, 1]} : vector<16x96xf32> to vector<16x32xf32>
    %9 = vector.shape_cast %8 : vector<16x32xf32> to vector<2x8x32xf32>
    %10 = vector.extract_strided_slice %5 {offsets = [0, 64], sizes = [16, 32], strides = [1, 1]} : vector<16x96xf32> to vector<16x32xf32>
    %11 = vector.shape_cast %10 : vector<16x32xf32> to vector<2x8x32xf32>
    %c0_5 = arith.constant 0 : index
    %c0_6 = arith.constant 0 : index
    %c0_7 = arith.constant 0 : index
    %12 = vector.load %arg2[%c0_5, %c0_6, %c0_7] : memref<2x8x8xf32, #tpu.memory_space<vmem>>, vector<2x8x8xf32>
    %cst_8 = arith.constant 0.176776692 : f32
    %13 = vector.broadcast %cst_8 : f32 to vector<2x8x32xf32>
    %14 = arith.mulf %7, %13 : vector<2x8x32xf32>
    "tpu.trace_start"() <{level = 10 : i32, message = "bqd,bkd->bqk"}> : () -> ()
    %cst_9 = arith.constant dense<0.000000e+00> : vector<2x8x8xf32>
    %15 = tpu.matmul %14, %9, %cst_9 {dimension_numbers = #tpu.dot_dimension_numbers<[2], [2], [1], [1], [0, 0, 0, 1, 1, 1], [0], [0]>} : vector<2x8x32xf32>, vector<2x8x32xf32>, vector<2x8x8xf32> -> vector<2x8x8xf32>
    "tpu.trace_stop"() : () -> ()
    %16 = arith.addf %15, %12 : vector<2x8x8xf32>
    %cst_10 = arith.constant dense<0xFF800000> : vector<2x8xf32>
    %17 = vector.multi_reduction <maximumf>, %16, %cst_10 [2] : vector<2x8x8xf32> to vector<2x8xf32>
    %18 = vector.shape_cast %17 : vector<2x8xf32> to vector<2x8x1xf32>
    %19 = vector.broadcast %18 : vector<2x8x1xf32> to vector<2x8x8xf32>
    %20 = arith.subf %16, %19 : vector<2x8x8xf32>
    %21 = math.exp %20 : vector<2x8x8xf32>
    %cst_11 = arith.constant dense<0.000000e+00> : vector<2x8xf32>
    %22 = vector.multi_reduction <add>, %21, %cst_11 [2] : vector<2x8x8xf32> to vector<2x8xf32>
    %23 = vector.shape_cast %22 : vector<2x8xf32> to vector<2x8x1xf32>
    %24 = tpu.reciprocal %23 {approx = true} : vector<2x8x1xf32> -> vector<2x8x1xf32>
    %25 = vector.broadcast %24 : vector<2x8x1xf32> to vector<2x8x8xf32>
    %26 = arith.mulf %21, %25 : vector<2x8x8xf32>
    "tpu.trace_start"() <{level = 10 : i32, message = "bqk,bkd->bqd"}> : () -> ()
    %cst_12 = arith.constant dense<0.000000e+00> : vector<2x8x32xf32>
    %27 = tpu.matmul %26, %11, %cst_12 {dimension_numbers = #tpu.dot_dimension_numbers<[2], [1], [1], [2], [0, 0, 0, 1, 1, 2], [0], [0]>} : vector<2x8x8xf32>, vector<2x8x32xf32>, vector<2x8x32xf32> -> vector<2x8x32xf32>
    "tpu.trace_stop"() : () -> ()
    %28 = vector.shape_cast %27 : vector<2x8x32xf32> to vector<16x32xf32>
    %c0_13 = arith.constant 0 : index
    %c0_14 = arith.constant 0 : index
    %29 = vector.load %arg7[%c0_13, %c0_14] : memref<32x32xf32, #tpu.memory_space<vmem>>, vector<32x32xf32>
    %cst_15 = arith.constant dense<0.000000e+00> : vector<16x32xf32>
    %30 = tpu.matmul %28, %29, %cst_15 {dimension_numbers = #tpu.dot_dimension_numbers<[1], [0], [0], [1], [0, 0, 1, 1], [], []>} : vector<16x32xf32>, vector<32x32xf32>, vector<16x32xf32> -> vector<16x32xf32>
    %c0_16 = arith.constant 0 : index
    %c0_17 = arith.constant 0 : index
    %31 = vector.load %arg8[%c0_16, %c0_17] : memref<1x32xf32, #tpu.memory_space<vmem>>, vector<1x32xf32>
    %32 = vector.broadcast %31 : vector<1x32xf32> to vector<16x32xf32>
    %33 = arith.addf %30, %32 : vector<16x32xf32>
    %34 = arith.addf %0, %33 : vector<16x32xf32>
    %c0_18 = arith.constant 0 : index
    %c0_19 = arith.constant 0 : index
    %35 = vector.load %arg9[%c0_18, %c0_19] : memref<1x32xf32, #tpu.memory_space<vmem>>, vector<1x32xf32>
    %c0_20 = arith.constant 0 : index
    %c0_21 = arith.constant 0 : index
    %36 = vector.load %arg10[%c0_20, %c0_21] : memref<1x32xf32, #tpu.memory_space<vmem>>, vector<1x32xf32>
    %cst_22 = arith.constant dense<0.000000e+00> : vector<16xf32>
    %37 = vector.multi_reduction <add>, %34, %cst_22 [1] : vector<16x32xf32> to vector<16xf32>
    %38 = vector.shape_cast %37 : vector<16xf32> to vector<16x1xf32>
    %cst_23 = arith.constant 3.200000e+01 : f32
    %39 = vector.broadcast %cst_23 : f32 to vector<16x1xf32>
    %40 = arith.divf %38, %39 : vector<16x1xf32>
    %41 = vector.broadcast %40 : vector<16x1xf32> to vector<16x32xf32>
    %42 = arith.subf %34, %41 : vector<16x32xf32>
    %43 = arith.mulf %42, %42 : vector<16x32xf32>
    %cst_24 = arith.constant dense<0.000000e+00> : vector<16xf32>
    %44 = vector.multi_reduction <add>, %43, %cst_24 [1] : vector<16x32xf32> to vector<16xf32>
    %45 = vector.shape_cast %44 : vector<16xf32> to vector<16x1xf32>
    %cst_25 = arith.constant 3.200000e+01 : f32
    %46 = vector.broadcast %cst_25 : f32 to vector<16x1xf32>
    %47 = arith.divf %45, %46 : vector<16x1xf32>
    %cst_26 = arith.constant 9.99999997E-7 : f32
    %48 = vector.broadcast %cst_26 : f32 to vector<16x1xf32>
    %49 = arith.addf %47, %48 : vector<16x1xf32>
    %50 = math.rsqrt %49 : vector<16x1xf32>
    %51 = vector.broadcast %50 : vector<16x1xf32> to vector<16x32xf32>
    %52 = arith.mulf %42, %51 : vector<16x32xf32>
    %53 = vector.broadcast %35 : vector<1x32xf32> to vector<16x32xf32>
    %54 = arith.mulf %52, %53 : vector<16x32xf32>
    %55 = vector.broadcast %36 : vector<1x32xf32> to vector<16x32xf32>
    %56 = arith.addf %54, %55 : vector<16x32xf32>
    %c0_27 = arith.constant 0 : index
    %c0_28 = arith.constant 0 : index
    %57 = vector.load %arg11[%c0_27, %c0_28] : memref<32x64xf32, #tpu.memory_space<vmem>>, vector<32x64xf32>
    %cst_29 = arith.constant dense<0.000000e+00> : vector<16x64xf32>
    %58 = tpu.matmul %56, %57, %cst_29 {dimension_numbers = #tpu.dot_dimension_numbers<[1], [0], [0], [1], [0, 0, 1, 1], [], []>} : vector<16x32xf32>, vector<32x64xf32>, vector<16x64xf32> -> vector<16x64xf32>
    %c0_30 = arith.constant 0 : index
    %c0_31 = arith.constant 0 : index
    %59 = vector.load %arg12[%c0_30, %c0_31] : memref<1x64xf32, #tpu.memory_space<vmem>>, vector<1x64xf32>
    %60 = vector.broadcast %59 : vector<1x64xf32> to vector<16x64xf32>
    %61 = arith.addf %58, %60 : vector<16x64xf32>
    %cst_32 = arith.constant 0.000000e+00 : f32
    %62 = vector.broadcast %cst_32 : f32 to vector<16x64xf32>
    %63 = arith.maximumf %61, %62 : vector<16x64xf32>
    %c0_33 = arith.constant 0 : index
    %c0_34 = arith.constant 0 : index
    %64 = vector.load %arg13[%c0_33, %c0_34] : memref<64x32xf32, #tpu.memory_space<vmem>>, vector<64x32xf32>
    %cst_35 = arith.constant dense<0.000000e+00> : vector<16x32xf32>
    %65 = tpu.matmul %63, %64, %cst_35 {dimension_numbers = #tpu.dot_dimension_numbers<[1], [0], [0], [1], [0, 0, 1, 1], [], []>} : vector<16x64xf32>, vector<64x32xf32>, vector<16x32xf32> -> vector<16x32xf32>
    %c0_36 = arith.constant 0 : index
    %c0_37 = arith.constant 0 : index
    %66 = vector.load %arg14[%c0_36, %c0_37] : memref<1x32xf32, #tpu.memory_space<vmem>>, vector<1x32xf32>
    %67 = vector.broadcast %66 : vector<1x32xf32> to vector<16x32xf32>
    %68 = arith.addf %65, %67 : vector<16x32xf32>
    %69 = arith.addf %56, %68 : vector<16x32xf32>
    %c0_38 = arith.constant 0 : index
    %c0_39 = arith.constant 0 : index
    %70 = vector.load %arg15[%c0_38, %c0_39] : memref<1x32xf32, #tpu.memory_space<vmem>>, vector<1x32xf32>
    %c0_40 = arith.constant 0 : index
    %c0_41 = arith.constant 0 : index
    %71 = vector.load %arg16[%c0_40, %c0_41] : memref<1x32xf32, #tpu.memory_space<vmem>>, vector<1x32xf32>
    %cst_42 = arith.constant dense<0.000000e+00> : vector<16xf32>
    %72 = vector.multi_reduction <add>, %69, %cst_42 [1] : vector<16x32xf32> to vector<16xf32>
    %73 = vector.shape_cast %72 : vector<16xf32> to vector<16x1xf32>
    %cst_43 = arith.constant 3.200000e+01 : f32
    %74 = vector.broadcast %cst_43 : f32 to vector<16x1xf32>
    %75 = arith.divf %73, %74 : vector<16x1xf32>
    %76 = vector.broadcast %75 : vector<16x1xf32> to vector<16x32xf32>
    %77 = arith.subf %69, %76 : vector<16x32xf32>
    %78 = arith.mulf %77, %77 : vector<16x32xf32>
    %cst_44 = arith.constant dense<0.000000e+00> : vector<16xf32>
    %79 = vector.multi_reduction <add>, %78, %cst_44 [1] : vector<16x32xf32> to vector<16xf32>
    %80 = vector.shape_cast %79 : vector<16xf32> to vector<16x1xf32>
    %cst_45 = arith.constant 3.200000e+01 : f32
    %81 = vector.broadcast %cst_45 : f32 to vector<16x1xf32>
    %82 = arith.divf %80, %81 : vector<16x1xf32>
    %cst_46 = arith.constant 9.99999997E-7 : f32
    %83 = vector.broadcast %cst_46 : f32 to vector<16x1xf32>
    %84 = arith.addf %82, %83 : vector<16x1xf32>
    %85 = math.rsqrt %84 : vector<16x1xf32>
    %86 = vector.broadcast %85 : vector<16x1xf32> to vector<16x32xf32>
    %87 = arith.mulf %77, %86 : vector<16x32xf32>
    %88 = vector.broadcast %70 : vector<1x32xf32> to vector<16x32xf32>
    %89 = arith.mulf %87, %88 : vector<16x32xf32>
    %90 = vector.broadcast %71 : vector<1x32xf32> to vector<16x32xf32>
    %91 = arith.addf %89, %90 : vector<16x32xf32>
    %c0_47 = arith.constant 0 : index
    %c0_48 = arith.constant 0 : index
    %92 = vector.load %arg1[%c0_47, %c0_48] : memref<16x32xf32, #tpu.memory_space<vmem>>, vector<16x32xf32>
    %c0_49 = arith.constant 0 : index
    %c0_50 = arith.constant 0 : index
    %93 = vector.load %arg17[%c0_49, %c0_50] : memref<32x96xf32, #tpu.memory_space<vmem>>, vector<32x96xf32>
    %cst_51 = arith.constant dense<0.000000e+00> : vector<16x96xf32>
    %94 = tpu.matmul %92, %93, %cst_51 {dimension_numbers = #tpu.dot_dimension_numbers<[1], [0], [0], [1], [0, 0, 1, 1], [], []>} : vector<16x32xf32>, vector<32x96xf32>, vector<16x96xf32> -> vector<16x96xf32>
    %c0_52 = arith.constant 0 : index
    %c0_53 = arith.constant 0 : index
    %95 = vector.load %arg18[%c0_52, %c0_53] : memref<1x96xf32, #tpu.memory_space<vmem>>, vector<1x96xf32>
    %96 = vector.broadcast %95 : vector<1x96xf32> to vector<16x96xf32>
    %97 = arith.addf %94, %96 : vector<16x96xf32>
    %98 = vector.extract_strided_slice %97 {offsets = [0, 0], sizes = [16, 32], strides = [1, 1]} : vector<16x96xf32> to vector<16x32xf32>
    %99 = vector.shape_cast %98 : vector<16x32xf32> to vector<2x8x32xf32>
    %100 = vector.extract_strided_slice %97 {offsets = [0, 32], sizes = [16, 32], strides = [1, 1]} : vector<16x96xf32> to vector<16x32xf32>
    %101 = vector.shape_cast %100 : vector<16x32xf32> to vector<2x8x32xf32>
    %102 = vector.extract_strided_slice %97 {offsets = [0, 64], sizes = [16, 32], strides = [1, 1]} : vector<16x96xf32> to vector<16x32xf32>
    %103 = vector.shape_cast %102 : vector<16x32xf32> to vector<2x8x32xf32>
    %c0_54 = arith.constant 0 : index
    %c0_55 = arith.constant 0 : index
    %c0_56 = arith.constant 0 : index
    %104 = vector.load %arg3[%c0_54, %c0_55, %c0_56] : memref<2x8x8xf32, #tpu.memory_space<vmem>>, vector<2x8x8xf32>
    %cst_57 = arith.constant 0.176776692 : f32
    %105 = vector.broadcast %cst_57 : f32 to vector<2x8x32xf32>
    %106 = arith.mulf %99, %105 : vector<2x8x32xf32>
    "tpu.trace_start"() <{level = 10 : i32, message = "bqd,bkd->bqk"}> : () -> ()
    %cst_58 = arith.constant dense<0.000000e+00> : vector<2x8x8xf32>
    %107 = tpu.matmul %106, %101, %cst_58 {dimension_numbers = #tpu.dot_dimension_numbers<[2], [2], [1], [1], [0, 0, 0, 1, 1, 1], [0], [0]>} : vector<2x8x32xf32>, vector<2x8x32xf32>, vector<2x8x8xf32> -> vector<2x8x8xf32>
    "tpu.trace_stop"() : () -> ()
    %108 = arith.addf %107, %104 : vector<2x8x8xf32>
    %cst_59 = arith.constant dense<0xFF800000> : vector<2x8xf32>
    %109 = vector.multi_reduction <maximumf>, %108, %cst_59 [2] : vector<2x8x8xf32> to vector<2x8xf32>
    %110 = vector.shape_cast %109 : vector<2x8xf32> to vector<2x8x1xf32>
    %111 = vector.broadcast %110 : vector<2x8x1xf32> to vector<2x8x8xf32>
    %112 = arith.subf %108, %111 : vector<2x8x8xf32>
    %113 = math.exp %112 : vector<2x8x8xf32>
    %cst_60 = arith.constant dense<0.000000e+00> : vector<2x8xf32>
    %114 = vector.multi_reduction <add>, %113, %cst_60 [2] : vector<2x8x8xf32> to vector<2x8xf32>
    %115 = vector.shape_cast %114 : vector<2x8xf32> to vector<2x8x1xf32>
    %116 = tpu.reciprocal %115 {approx = true} : vector<2x8x1xf32> -> vector<2x8x1xf32>
    %117 = vector.broadcast %116 : vector<2x8x1xf32> to vector<2x8x8xf32>
    %118 = arith.mulf %113, %117 : vector<2x8x8xf32>
    "tpu.trace_start"() <{level = 10 : i32, message = "bqk,bkd->bqd"}> : () -> ()
    %cst_61 = arith.constant dense<0.000000e+00> : vector<2x8x32xf32>
    %119 = tpu.matmul %118, %103, %cst_61 {dimension_numbers = #tpu.dot_dimension_numbers<[2], [1], [1], [2], [0, 0, 0, 1, 1, 2], [0], [0]>} : vector<2x8x8xf32>, vector<2x8x32xf32>, vector<2x8x32xf32> -> vector<2x8x32xf32>
    "tpu.trace_stop"() : () -> ()
    %120 = vector.shape_cast %119 : vector<2x8x32xf32> to vector<16x32xf32>
    %c0_62 = arith.constant 0 : index
    %c0_63 = arith.constant 0 : index
    %121 = vector.load %arg19[%c0_62, %c0_63] : memref<32x32xf32, #tpu.memory_space<vmem>>, vector<32x32xf32>
    %cst_64 = arith.constant dense<0.000000e+00> : vector<16x32xf32>
    %122 = tpu.matmul %120, %121, %cst_64 {dimension_numbers = #tpu.dot_dimension_numbers<[1], [0], [0], [1], [0, 0, 1, 1], [], []>} : vector<16x32xf32>, vector<32x32xf32>, vector<16x32xf32> -> vector<16x32xf32>
    %c0_65 = arith.constant 0 : index
    %c0_66 = arith.constant 0 : index
    %123 = vector.load %arg20[%c0_65, %c0_66] : memref<1x32xf32, #tpu.memory_space<vmem>>, vector<1x32xf32>
    %124 = vector.broadcast %123 : vector<1x32xf32> to vector<16x32xf32>
    %125 = arith.addf %122, %124 : vector<16x32xf32>
    %126 = arith.addf %92, %125 : vector<16x32xf32>
    %c0_67 = arith.constant 0 : index
    %c0_68 = arith.constant 0 : index
    %127 = vector.load %arg21[%c0_67, %c0_68] : memref<1x32xf32, #tpu.memory_space<vmem>>, vector<1x32xf32>
    %c0_69 = arith.constant 0 : index
    %c0_70 = arith.constant 0 : index
    %128 = vector.load %arg22[%c0_69, %c0_70] : memref<1x32xf32, #tpu.memory_space<vmem>>, vector<1x32xf32>
    %cst_71 = arith.constant dense<0.000000e+00> : vector<16xf32>
    %129 = vector.multi_reduction <add>, %126, %cst_71 [1] : vector<16x32xf32> to vector<16xf32>
    %130 = vector.shape_cast %129 : vector<16xf32> to vector<16x1xf32>
    %cst_72 = arith.constant 3.200000e+01 : f32
    %131 = vector.broadcast %cst_72 : f32 to vector<16x1xf32>
    %132 = arith.divf %130, %131 : vector<16x1xf32>
    %133 = vector.broadcast %132 : vector<16x1xf32> to vector<16x32xf32>
    %134 = arith.subf %126, %133 : vector<16x32xf32>
    %135 = arith.mulf %134, %134 : vector<16x32xf32>
    %cst_73 = arith.constant dense<0.000000e+00> : vector<16xf32>
    %136 = vector.multi_reduction <add>, %135, %cst_73 [1] : vector<16x32xf32> to vector<16xf32>
    %137 = vector.shape_cast %136 : vector<16xf32> to vector<16x1xf32>
    %cst_74 = arith.constant 3.200000e+01 : f32
    %138 = vector.broadcast %cst_74 : f32 to vector<16x1xf32>
    %139 = arith.divf %137, %138 : vector<16x1xf32>
    %cst_75 = arith.constant 9.99999997E-7 : f32
    %140 = vector.broadcast %cst_75 : f32 to vector<16x1xf32>
    %141 = arith.addf %139, %140 : vector<16x1xf32>
    %142 = math.rsqrt %141 : vector<16x1xf32>
    %143 = vector.broadcast %142 : vector<16x1xf32> to vector<16x32xf32>
    %144 = arith.mulf %134, %143 : vector<16x32xf32>
    %145 = vector.broadcast %127 : vector<1x32xf32> to vector<16x32xf32>
    %146 = arith.mulf %144, %145 : vector<16x32xf32>
    %147 = vector.broadcast %128 : vector<1x32xf32> to vector<16x32xf32>
    %148 = arith.addf %146, %147 : vector<16x32xf32>
    %c0_76 = arith.constant 0 : index
    %c0_77 = arith.constant 0 : index
    %149 = vector.load %arg23[%c0_76, %c0_77] : memref<32x32xf32, #tpu.memory_space<vmem>>, vector<32x32xf32>
    %cst_78 = arith.constant dense<0.000000e+00> : vector<16x32xf32>
    %150 = tpu.matmul %148, %149, %cst_78 {dimension_numbers = #tpu.dot_dimension_numbers<[1], [0], [0], [1], [0, 0, 1, 1], [], []>} : vector<16x32xf32>, vector<32x32xf32>, vector<16x32xf32> -> vector<16x32xf32>
    %c0_79 = arith.constant 0 : index
    %c0_80 = arith.constant 0 : index
    %151 = vector.load %arg24[%c0_79, %c0_80] : memref<1x32xf32, #tpu.memory_space<vmem>>, vector<1x32xf32>
    %152 = vector.broadcast %151 : vector<1x32xf32> to vector<16x32xf32>
    %153 = arith.addf %150, %152 : vector<16x32xf32>
    %154 = vector.shape_cast %153 : vector<16x32xf32> to vector<2x8x32xf32>
    %c0_81 = arith.constant 0 : index
    %c0_82 = arith.constant 0 : index
    %155 = vector.load %arg25[%c0_81, %c0_82] : memref<32x64xf32, #tpu.memory_space<vmem>>, vector<32x64xf32>
    %cst_83 = arith.constant dense<0.000000e+00> : vector<16x64xf32>
    %156 = tpu.matmul %91, %155, %cst_83 {dimension_numbers = #tpu.dot_dimension_numbers<[1], [0], [0], [1], [0, 0, 1, 1], [], []>} : vector<16x32xf32>, vector<32x64xf32>, vector<16x64xf32> -> vector<16x64xf32>
    %c0_84 = arith.constant 0 : index
    %c0_85 = arith.constant 0 : index
    %157 = vector.load %arg26[%c0_84, %c0_85] : memref<1x64xf32, #tpu.memory_space<vmem>>, vector<1x64xf32>
    %158 = vector.broadcast %157 : vector<1x64xf32> to vector<16x64xf32>
    %159 = arith.addf %156, %158 : vector<16x64xf32>
    %160 = vector.extract_strided_slice %159 {offsets = [0, 0], sizes = [16, 32], strides = [1, 1]} : vector<16x64xf32> to vector<16x32xf32>
    %161 = vector.shape_cast %160 : vector<16x32xf32> to vector<2x8x32xf32>
    %162 = vector.extract_strided_slice %159 {offsets = [0, 32], sizes = [16, 32], strides = [1, 1]} : vector<16x64xf32> to vector<16x32xf32>
    %163 = vector.shape_cast %162 : vector<16x32xf32> to vector<2x8x32xf32>
    %c0_86 = arith.constant 0 : index
    %c0_87 = arith.constant 0 : index
    %c0_88 = arith.constant 0 : index
    %164 = vector.load %arg4[%c0_86, %c0_87, %c0_88] : memref<2x8x8xf32, #tpu.memory_space<vmem>>, vector<2x8x8xf32>
    %cst_89 = arith.constant 0.176776692 : f32
    %165 = vector.broadcast %cst_89 : f32 to vector<2x8x32xf32>
    %166 = arith.mulf %154, %165 : vector<2x8x32xf32>
    "tpu.trace_start"() <{level = 10 : i32, message = "bqd,bkd->bqk"}> : () -> ()
    %cst_90 = arith.constant dense<0.000000e+00> : vector<2x8x8xf32>
    %167 = tpu.matmul %166, %161, %cst_90 {dimension_numbers = #tpu.dot_dimension_numbers<[2], [2], [1], [1], [0, 0, 0, 1, 1, 1], [0], [0]>} : vector<2x8x32xf32>, vector<2x8x32xf32>, vector<2x8x8xf32> -> vector<2x8x8xf32>
    "tpu.trace_stop"() : () -> ()
    %168 = arith.addf %167, %164 : vector<2x8x8xf32>
    %cst_91 = arith.constant dense<0xFF800000> : vector<2x8xf32>
    %169 = vector.multi_reduction <maximumf>, %168, %cst_91 [2] : vector<2x8x8xf32> to vector<2x8xf32>
    %170 = vector.shape_cast %169 : vector<2x8xf32> to vector<2x8x1xf32>
    %171 = vector.broadcast %170 : vector<2x8x1xf32> to vector<2x8x8xf32>
    %172 = arith.subf %168, %171 : vector<2x8x8xf32>
    %173 = math.exp %172 : vector<2x8x8xf32>
    %cst_92 = arith.constant dense<0.000000e+00> : vector<2x8xf32>
    %174 = vector.multi_reduction <add>, %173, %cst_92 [2] : vector<2x8x8xf32> to vector<2x8xf32>
    %175 = vector.shape_cast %174 : vector<2x8xf32> to vector<2x8x1xf32>
    %176 = tpu.reciprocal %175 {approx = true} : vector<2x8x1xf32> -> vector<2x8x1xf32>
    %177 = vector.broadcast %176 : vector<2x8x1xf32> to vector<2x8x8xf32>
    %178 = arith.mulf %173, %177 : vector<2x8x8xf32>
    "tpu.trace_start"() <{level = 10 : i32, message = "bqk,bkd->bqd"}> : () -> ()
    %cst_93 = arith.constant dense<0.000000e+00> : vector<2x8x32xf32>
    %179 = tpu.matmul %178, %163, %cst_93 {dimension_numbers = #tpu.dot_dimension_numbers<[2], [1], [1], [2], [0, 0, 0, 1, 1, 2], [0], [0]>} : vector<2x8x8xf32>, vector<2x8x32xf32>, vector<2x8x32xf32> -> vector<2x8x32xf32>
    "tpu.trace_stop"() : () -> ()
    %180 = vector.shape_cast %179 : vector<2x8x32xf32> to vector<16x32xf32>
    %c0_94 = arith.constant 0 : index
    %c0_95 = arith.constant 0 : index
    %181 = vector.load %arg27[%c0_94, %c0_95] : memref<32x32xf32, #tpu.memory_space<vmem>>, vector<32x32xf32>
    %cst_96 = arith.constant dense<0.000000e+00> : vector<16x32xf32>
    %182 = tpu.matmul %180, %181, %cst_96 {dimension_numbers = #tpu.dot_dimension_numbers<[1], [0], [0], [1], [0, 0, 1, 1], [], []>} : vector<16x32xf32>, vector<32x32xf32>, vector<16x32xf32> -> vector<16x32xf32>
    %c0_97 = arith.constant 0 : index
    %c0_98 = arith.constant 0 : index
    %183 = vector.load %arg28[%c0_97, %c0_98] : memref<1x32xf32, #tpu.memory_space<vmem>>, vector<1x32xf32>
    %184 = vector.broadcast %183 : vector<1x32xf32> to vector<16x32xf32>
    %185 = arith.addf %182, %184 : vector<16x32xf32>
    %186 = arith.addf %148, %185 : vector<16x32xf32>
    %c0_99 = arith.constant 0 : index
    %c0_100 = arith.constant 0 : index
    %187 = vector.load %arg29[%c0_99, %c0_100] : memref<1x32xf32, #tpu.memory_space<vmem>>, vector<1x32xf32>
    %c0_101 = arith.constant 0 : index
    %c0_102 = arith.constant 0 : index
    %188 = vector.load %arg30[%c0_101, %c0_102] : memref<1x32xf32, #tpu.memory_space<vmem>>, vector<1x32xf32>
    %cst_103 = arith.constant dense<0.000000e+00> : vector<16xf32>
    %189 = vector.multi_reduction <add>, %186, %cst_103 [1] : vector<16x32xf32> to vector<16xf32>
    %190 = vector.shape_cast %189 : vector<16xf32> to vector<16x1xf32>
    %cst_104 = arith.constant 3.200000e+01 : f32
    %191 = vector.broadcast %cst_104 : f32 to vector<16x1xf32>
    %192 = arith.divf %190, %191 : vector<16x1xf32>
    %193 = vector.broadcast %192 : vector<16x1xf32> to vector<16x32xf32>
    %194 = arith.subf %186, %193 : vector<16x32xf32>
    %195 = arith.mulf %194, %194 : vector<16x32xf32>
    %cst_105 = arith.constant dense<0.000000e+00> : vector<16xf32>
    %196 = vector.multi_reduction <add>, %195, %cst_105 [1] : vector<16x32xf32> to vector<16xf32>
    %197 = vector.shape_cast %196 : vector<16xf32> to vector<16x1xf32>
    %cst_106 = arith.constant 3.200000e+01 : f32
    %198 = vector.broadcast %cst_106 : f32 to vector<16x1xf32>
    %199 = arith.divf %197, %198 : vector<16x1xf32>
    %cst_107 = arith.constant 9.99999997E-7 : f32
    %200 = vector.broadcast %cst_107 : f32 to vector<16x1xf32>
    %201 = arith.addf %199, %200 : vector<16x1xf32>
    %202 = math.rsqrt %201 : vector<16x1xf32>
    %203 = vector.broadcast %202 : vector<16x1xf32> to vector<16x32xf32>
    %204 = arith.mulf %194, %203 : vector<16x32xf32>
    %205 = vector.broadcast %187 : vector<1x32xf32> to vector<16x32xf32>
    %206 = arith.mulf %204, %205 : vector<16x32xf32>
    %207 = vector.broadcast %188 : vector<1x32xf32> to vector<16x32xf32>
    %208 = arith.addf %206, %207 : vector<16x32xf32>
    %c0_108 = arith.constant 0 : index
    %c0_109 = arith.constant 0 : index
    %209 = vector.load %arg31[%c0_108, %c0_109] : memref<32x64xf32, #tpu.memory_space<vmem>>, vector<32x64xf32>
    %cst_110 = arith.constant dense<0.000000e+00> : vector<16x64xf32>
    %210 = tpu.matmul %208, %209, %cst_110 {dimension_numbers = #tpu.dot_dimension_numbers<[1], [0], [0], [1], [0, 0, 1, 1], [], []>} : vector<16x32xf32>, vector<32x64xf32>, vector<16x64xf32> -> vector<16x64xf32>
    %c0_111 = arith.constant 0 : index
    %c0_112 = arith.constant 0 : index
    %211 = vector.load %arg32[%c0_111, %c0_112] : memref<1x64xf32, #tpu.memory_space<vmem>>, vector<1x64xf32>
    %212 = vector.broadcast %211 : vector<1x64xf32> to vector<16x64xf32>
    %213 = arith.addf %210, %212 : vector<16x64xf32>
    %cst_113 = arith.constant 0.000000e+00 : f32
    %214 = vector.broadcast %cst_113 : f32 to vector<16x64xf32>
    %215 = arith.maximumf %213, %214 : vector<16x64xf32>
    %c0_114 = arith.constant 0 : index
    %c0_115 = arith.constant 0 : index
    %216 = vector.load %arg33[%c0_114, %c0_115] : memref<64x32xf32, #tpu.memory_space<vmem>>, vector<64x32xf32>
    %cst_116 = arith.constant dense<0.000000e+00> : vector<16x32xf32>
    %217 = tpu.matmul %215, %216, %cst_116 {dimension_numbers = #tpu.dot_dimension_numbers<[1], [0], [0], [1], [0, 0, 1, 1], [], []>} : vector<16x64xf32>, vector<64x32xf32>, vector<16x32xf32> -> vector<16x32xf32>
    %c0_117 = arith.constant 0 : index
    %c0_118 = arith.constant 0 : index
    %218 = vector.load %arg34[%c0_117, %c0_118] : memref<1x32xf32, #tpu.memory_space<vmem>>, vector<1x32xf32>
    %219 = vector.broadcast %218 : vector<1x32xf32> to vector<16x32xf32>
    %220 = arith.addf %217, %219 : vector<16x32xf32>
    %221 = arith.addf %208, %220 : vector<16x32xf32>
    %c0_119 = arith.constant 0 : index
    %c0_120 = arith.constant 0 : index
    %222 = vector.load %arg35[%c0_119, %c0_120] : memref<1x32xf32, #tpu.memory_space<vmem>>, vector<1x32xf32>
    %c0_121 = arith.constant 0 : index
    %c0_122 = arith.constant 0 : index
    %223 = vector.load %arg36[%c0_121, %c0_122] : memref<1x32xf32, #tpu.memory_space<vmem>>, vector<1x32xf32>
    %cst_123 = arith.constant dense<0.000000e+00> : vector<16xf32>
    %224 = vector.multi_reduction <add>, %221, %cst_123 [1] : vector<16x32xf32> to vector<16xf32>
    %225 = vector.shape_cast %224 : vector<16xf32> to vector<16x1xf32>
    %cst_124 = arith.constant 3.200000e+01 : f32
    %226 = vector.broadcast %cst_124 : f32 to vector<16x1xf32>
    %227 = arith.divf %225, %226 : vector<16x1xf32>
    %228 = vector.broadcast %227 : vector<16x1xf32> to vector<16x32xf32>
    %229 = arith.subf %221, %228 : vector<16x32xf32>
    %230 = arith.mulf %229, %229 : vector<16x32xf32>
    %cst_125 = arith.constant dense<0.000000e+00> : vector<16xf32>
    %231 = vector.multi_reduction <add>, %230, %cst_125 [1] : vector<16x32xf32> to vector<16xf32>
    %232 = vector.shape_cast %231 : vector<16xf32> to vector<16x1xf32>
    %cst_126 = arith.constant 3.200000e+01 : f32
    %233 = vector.broadcast %cst_126 : f32 to vector<16x1xf32>
    %234 = arith.divf %232, %233 : vector<16x1xf32>
    %cst_127 = arith.constant 9.99999997E-7 : f32
    %235 = vector.broadcast %cst_127 : f32 to vector<16x1xf32>
    %236 = arith.addf %234, %235 : vector<16x1xf32>
    %237 = math.rsqrt %236 : vector<16x1xf32>
    %238 = vector.broadcast %237 : vector<16x1xf32> to vector<16x32xf32>
    %239 = arith.mulf %229, %238 : vector<16x32xf32>
    %240 = vector.broadcast %222 : vector<1x32xf32> to vector<16x32xf32>
    %241 = arith.mulf %239, %240 : vector<16x32xf32>
    %242 = vector.broadcast %223 : vector<1x32xf32> to vector<16x32xf32>
    %243 = arith.addf %241, %242 : vector<16x32xf32>
    %c0_128 = arith.constant 0 : index
    %c0_129 = arith.constant 0 : index
    %244 = vector.load %arg37[%c0_128, %c0_129] : memref<16x32xf32, #tpu.memory_space<vmem>>, vector<16x32xf32>
    tpu.vector_store %arg37[%c0_128, %c0_129], %243 {strides = array<i32>} : memref<16x32xf32, #tpu.memory_space<vmem>>, vector<16x32xf32>,
    return
  }
}

</mosaic_0001>

<llo_original>
// kernel: encode_decode_forward.1
$region0: #{encode_decode_forward.1}
  #allocation0 [shape = 'u32[]', space=smem, size = 0x4, offset = 0x4, fixed_abs, tag = 'smem constant byte address 0x4 - core index']
  #allocation1 [shape = 'u32[72,128]{1,0:T(1,128)}', space=vmem, size = 0x9000, scoped, tag = 'internal scratch']
  %s0 = inlined_call_operand.smem [shape: u32[38], index: -1, kind: input, shape index: {}]
  %s1 = sld [smem:[%s0]]
  %s2 = scalar_lea.smem %s0, 1
  %s3 = sld [smem:[%s2]]
  %s4 = scalar_lea.smem %s0, 2
  %s5 = sld [smem:[%s4]]
  %s6 = scalar_lea.smem %s0, 3
  %s7 = sld [smem:[%s6]]
  %s8 = scalar_lea.smem %s0, 4
  %s9 = sld [smem:[%s8]]
  %s10 = scalar_lea.smem %s0, 5
  %s11 = sld [smem:[%s10]]
  %s12 = scalar_lea.smem %s0, 6
  %s13 = sld [smem:[%s12]]
  %s14 = scalar_lea.smem %s0, 7
  %s15 = sld [smem:[%s14]]
  %s16 = scalar_lea.smem %s0, 8
  %s17 = sld [smem:[%s16]]
  %s18 = scalar_lea.smem %s0, 9
  %s19 = sld [smem:[%s18]]
  %s20 = scalar_lea.smem %s0, 10
  %s21 = sld [smem:[%s20]]
  %s22 = scalar_lea.smem %s0, 11
  %s23 = sld [smem:[%s22]]
  %s24 = scalar_lea.smem %s0, 12
  %s25 = sld [smem:[%s24]]
  %s26 = scalar_lea.smem %s0, 13
  %s27 = sld [smem:[%s26]]
  %s28 = scalar_lea.smem %s0, 14
  %s29 = sld [smem:[%s28]]
  %s30 = scalar_lea.smem %s0, 15
  %s31 = sld [smem:[%s30]]
  %s32 = scalar_lea.smem %s0, 16
  %s33 = sld [smem:[%s32]]
  %s34 = scalar_lea.smem %s0, 17
  %s35 = sld [smem:[%s34]]
  %s36 = scalar_lea.smem %s0, 18
  %s37 = sld [smem:[%s36]]
  %s38 = scalar_lea.smem %s0, 19
  %s39 = sld [smem:[%s38]]
  %s40 = scalar_lea.smem %s0, 20
  %s41 = sld [smem:[%s40]]
  %s42 = scalar_lea.smem %s0, 21
  %s43 = sld [smem:[%s42]]
  %s44 = scalar_lea.smem %s0, 22
  %s45 = sld [smem:[%s44]]
  %s46 = scalar_lea.smem %s0, 23
  %s47 = sld [smem:[%s46]]
  %s48 = scalar_lea.smem %s0, 24
  %s49 = sld [smem:[%s48]]
  %s50 = scalar_lea.smem %s0, 25
  %s51 = sld [smem:[%s50]]
  %s52 = scalar_lea.smem %s0, 26
  %s53 = sld [smem:[%s52]]
  %s54 = scalar_lea.smem %s0, 27
  %s55 = sld [smem:[%s54]]
  %s56 = scalar_lea.smem %s0, 28
  %s57 = sld [smem:[%s56]]
  %s58 = scalar_lea.smem %s0, 29
  %s59 = sld [smem:[%s58]]
  %s60 = scalar_lea.smem %s0, 30
  %s61 = sld [smem:[%s60]]
  %s62 = scalar_lea.smem %s0, 31
  %s63 = sld [smem:[%s62]]
  %s64 = scalar_lea.smem %s0, 32
  %s65 = sld [smem:[%s64]]
  %s66 = scalar_lea.smem %s0, 33
  %s67 = sld [smem:[%s66]]
  %s68 = scalar_lea.smem %s0, 34
  %s69 = sld [smem:[%s68]]
  %s70 = scalar_lea.smem %s0, 35
  %s71 = sld [smem:[%s70]]
  %s72 = scalar_lea.smem %s0, 36
  %s73 = sld [smem:[%s72]]
  %s74 = scalar_lea.smem %s0, 37
  %s75 = sld [smem:[%s74]]
  %s76 = sld [smem:[#allocation0]]
  $region158: #{encode_decode_forward.1} parent=0
    _
  %s78 = ssub.s32 1, %s76
  %s79 = scalar_select 0, %s78, %s76
  $region1: #{encode_decode_forward.1} parent=0
    #allocation2 [shape = 'u8[8192]{0}', space=vmem, size = 0x2000, scoped, tag = 'output window, operand 0, single buffered']
    #allocation3 [shape = 's32[1]{0}', space=sflag, size = 0x4, scoped, tag = 'scoped memory for encode_decode_forward.1']
    %80 = vsyncpa [#allocation3], 0
    // Predicated region
    $region2: #{encode_decode_forward.1} parent=1 // pred_check
      _
    $region3: #{encode_decode_forward.1} parent=1 // pred_check_branch
      %82 = sbr.rel (0) target = $region5
    $region4: #{encode_decode_forward.1} parent=1 // pred_region
      _
    $region5: #{encode_decode_forward.1} parent=1 // pred_fallthru
      _
    // Predicated region
    $region6: #{encode_decode_forward.1} parent=1 // pred_check
      _
    $region7: #{encode_decode_forward.1} parent=1 // pred_check_branch
      %84 = sbr.rel (0) target = $region9
    $region8: #{encode_decode_forward.1} parent=1 // pred_region
      _
    $region9: #{encode_decode_forward.1} parent=1 // pred_fallthru
      _
    // Predicated region
    $region10: #{encode_decode_forward.1} parent=1 // pred_check
      _
    $region11: #{encode_decode_forward.1} parent=1 // pred_check_branch
      %86 = sbr.rel (0) target = $region13
    $region12: #{encode_decode_forward.1} parent=1 // pred_region
      _
    $region13: #{encode_decode_forward.1} parent=1 // pred_fallthru
      _
    // Predicated region
    $region14: #{encode_decode_forward.1} parent=1 // pred_check
      _
    $region15: #{encode_decode_forward.1} parent=1 // pred_check_branch
      %88 = sbr.rel (0) target = $region17
    $region16: #{encode_decode_forward.1} parent=1 // pred_region
      _
    $region17: #{encode_decode_forward.1} parent=1 // pred_fallthru
      _
    // Predicated region
    $region18: #{encode_decode_forward.1} parent=1 // pred_check
      _
    $region19: #{encode_decode_forward.1} parent=1 // pred_check_branch
      %90 = sbr.rel (0) target = $region21
    $region20: #{encode_decode_forward.1} parent=1 // pred_region
      _
    $region21: #{encode_decode_forward.1} parent=1 // pred_fallthru
      _
    // Predicated region
    $region22: #{encode_decode_forward.1} parent=1 // pred_check
      _
    $region23: #{encode_decode_forward.1} parent=1 // pred_check_branch
      %92 = sbr.rel (0) target = $region25
    $region24: #{encode_decode_forward.1} parent=1 // pred_region
      _
    $region25: #{encode_decode_forward.1} parent=1 // pred_fallthru
      _
    // Predicated region
    $region26: #{encode_decode_forward.1} parent=1 // pred_check
      _
    $region27: #{encode_decode_forward.1} parent=1 // pred_check_branch
      %94 = sbr.rel (0) target = $region29
    $region28: #{encode_decode_forward.1} parent=1 // pred_region
      _
    $region29: #{encode_decode_forward.1} parent=1 // pred_fallthru
      _
    // Predicated region
    $region30: #{encode_decode_forward.1} parent=1 // pred_check
      _
    $region31: #{encode_decode_forward.1} parent=1 // pred_check_branch
      %96 = sbr.rel (0) target = $region33
    $region32: #{encode_decode_forward.1} parent=1 // pred_region
      _
    $region33: #{encode_decode_forward.1} parent=1 // pred_fallthru
      _
    // Predicated region
    $region34: #{encode_decode_forward.1} parent=1 // pred_check
      _
    $region35: #{encode_decode_forward.1} parent=1 // pred_check_branch
      %98 = sbr.rel (0) target = $region37
    $region36: #{encode_decode_forward.1} parent=1 // pred_region
      _
    $region37: #{encode_decode_forward.1} parent=1 // pred_fallthru
      _
    // Predicated region
    $region38: #{encode_decode_forward.1} parent=1 // pred_check
      _
    $region39: #{encode_decode_forward.1} parent=1 // pred_check_branch
      %100 = sbr.rel (0) target = $region41
    $region40: #{encode_decode_forward.1} parent=1 // pred_region
      _
    $region41: #{encode_decode_forward.1} parent=1 // pred_fallthru
      _
    // Predicated region
    $region42: #{encode_decode_forward.1} parent=1 // pred_check
      _
    $region43: #{encode_decode_forward.1} parent=1 // pred_check_branch
      %102 = sbr.rel (0) target = $region45
    $region44: #{encode_decode_forward.1} parent=1 // pred_region
      _
    $region45: #{encode_decode_forward.1} parent=1 // pred_fallthru
      _
    // Predicated region
    $region46: #{encode_decode_forward.1} parent=1 // pred_check
      _
    $region47: #{encode_decode_forward.1} parent=1 // pred_check_branch
      %104 = sbr.rel (0) target = $region49
    $region48: #{encode_decode_forward.1} parent=1 // pred_region
      _
    $region49: #{encode_decode_forward.1} parent=1 // pred_fallthru
      _
    // Predicated region
    $region50: #{encode_decode_forward.1} parent=1 // pred_check
      _
    $region51: #{encode_decode_forward.1} parent=1 // pred_check_branch
      %106 = sbr.rel (0) target = $region53
    $region52: #{encode_decode_forward.1} parent=1 // pred_region
      _
    $region53: #{encode_decode_forward.1} parent=1 // pred_fallthru
      _
    // Predicated region
    $region54: #{encode_decode_forward.1} parent=1 // pred_check
      _
    $region55: #{encode_decode_forward.1} parent=1 // pred_check_branch
      %108 = sbr.rel (0) target = $region57
    $region56: #{encode_decode_forward.1} parent=1 // pred_region
      _
    $region57: #{encode_decode_forward.1} parent=1 // pred_fallthru
      _
    // Predicated region
    $region58: #{encode_decode_forward.1} parent=1 // pred_check
      _
    $region59: #{encode_decode_forward.1} parent=1 // pred_check_branch
      %110 = sbr.rel (0) target = $region61
    $region60: #{encode_decode_forward.1} parent=1 // pred_region
      _
    $region61: #{encode_decode_forward.1} parent=1 // pred_fallthru
      _
    // Predicated region
    $region62: #{encode_decode_forward.1} parent=1 // pred_check
      _
    $region63: #{encode_decode_forward.1} parent=1 // pred_check_branch
      %112 = sbr.rel (0) target = $region65
    $region64: #{encode_decode_forward.1} parent=1 // pred_region
      _
    $region65: #{encode_decode_forward.1} parent=1 // pred_fallthru
      _
    // Predicated region
    $region66: #{encode_decode_forward.1} parent=1 // pred_check
      _
    $region67: #{encode_decode_forward.1} parent=1 // pred_check_branch
      %114 = sbr.rel (0) target = $region69
    $region68: #{encode_decode_forward.1} parent=1 // pred_region
      _
    $region69: #{encode_decode_forward.1} parent=1 // pred_fallthru
      _
    // Predicated region
    $region70: #{encode_decode_forward.1} parent=1 // pred_check
      _
    $region71: #{encode_decode_forward.1} parent=1 // pred_check_branch
      %116 = sbr.rel (0) target = $region73
    $region72: #{encode_decode_forward.1} parent=1 // pred_region
      _
    $region73: #{encode_decode_forward.1} parent=1 // pred_fallthru
      _
    // Predicated region
    $region74: #{encode_decode_forward.1} parent=1 // pred_check
      _
    $region75: #{encode_decode_forward.1} parent=1 // pred_check_branch
      %118 = sbr.rel (0) target = $region77
    $region76: #{encode_decode_forward.1} parent=1 // pred_region
      _
    $region77: #{encode_decode_forward.1} parent=1 // pred_fallthru
      _
    // Predicated region
    $region78: #{encode_decode_forward.1} parent=1 // pred_check
      _
    $region79: #{encode_decode_forward.1} parent=1 // pred_check_branch
      %120 = sbr.rel (0) target = $region81
    $region80: #{encode_decode_forward.1} parent=1 // pred_region
      _
    $region81: #{encode_decode_forward.1} parent=1 // pred_fallthru
      _
    // Predicated region
    $region82: #{encode_decode_forward.1} parent=1 // pred_check
      _
    $region83: #{encode_decode_forward.1} parent=1 // pred_check_branch
      %122 = sbr.rel (0) target = $region85
    $region84: #{encode_decode_forward.1} parent=1 // pred_region
      _
    $region85: #{encode_decode_forward.1} parent=1 // pred_fallthru
      _
    // Predicated region
    $region86: #{encode_decode_forward.1} parent=1 // pred_check
      _
    $region87: #{encode_decode_forward.1} parent=1 // pred_check_branch
      %124 = sbr.rel (0) target = $region89
    $region88: #{encode_decode_forward.1} parent=1 // pred_region
      _
    $region89: #{encode_decode_forward.1} parent=1 // pred_fallthru
      _
    // Predicated region
    $region90: #{encode_decode_forward.1} parent=1 // pred_check
      _
    $region91: #{encode_decode_forward.1} parent=1 // pred_check_branch
      %126 = sbr.rel (0) target = $region93
    $region92: #{encode_decode_forward.1} parent=1 // pred_region
      _
    $region93: #{encode_decode_forward.1} parent=1 // pred_fallthru
      _
    // Predicated region
    $region94: #{encode_decode_forward.1} parent=1 // pred_check
      _
    $region95: #{encode_decode_forward.1} parent=1 // pred_check_branch
      %128 = sbr.rel (0) target = $region97
    $region96: #{encode_decode_forward.1} parent=1 // pred_region
      _
    $region97: #{encode_decode_forward.1} parent=1 // pred_fallthru
      _
    // Predicated region
    $region98: #{encode_decode_forward.1} parent=1 // pred_check
      _
    $region99: #{encode_decode_forward.1} parent=1 // pred_check_branch
      %130 = sbr.rel (0) target = $region101
    $region100: #{encode_decode_forward.1} parent=1 // pred_region
      _
    $region101: #{encode_decode_forward.1} parent=1 // pred_fallthru
      _
    // Predicated region
    $region102: #{encode_decode_forward.1} parent=1 // pred_check
      _
    $region103: #{encode_decode_forward.1} parent=1 // pred_check_branch
      %132 = sbr.rel (0) target = $region105
    $region104: #{encode_decode_forward.1} parent=1 // pred_region
      _
    $region105: #{encode_decode_forward.1} parent=1 // pred_fallthru
      _
    // Predicated region
    $region106: #{encode_decode_forward.1} parent=1 // pred_check
      _
    $region107: #{encode_decode_forward.1} parent=1 // pred_check_branch
      %134 = sbr.rel (0) target = $region109
    $region108: #{encode_decode_forward.1} parent=1 // pred_region
      _
    $region109: #{encode_decode_forward.1} parent=1 // pred_fallthru
      _
    // Predicated region
    $region110: #{encode_decode_forward.1} parent=1 // pred_check
      _
    $region111: #{encode_decode_forward.1} parent=1 // pred_check_branch
      %136 = sbr.rel (0) target = $region113
    $region112: #{encode_decode_forward.1} parent=1 // pred_region
      _
    $region113: #{encode_decode_forward.1} parent=1 // pred_fallthru
      _
    // Predicated region
    $region114: #{encode_decode_forward.1} parent=1 // pred_check
      _
    $region115: #{encode_decode_forward.1} parent=1 // pred_check_branch
      %138 = sbr.rel (0) target = $region117
    $region116: #{encode_decode_forward.1} parent=1 // pred_region
      _
    $region117: #{encode_decode_forward.1} parent=1 // pred_fallthru
      _
    // Predicated region
    $region118: #{encode_decode_forward.1} parent=1 // pred_check
      _
    $region119: #{encode_decode_forward.1} parent=1 // pred_check_branch
      %140 = sbr.rel (0) target = $region121
    $region120: #{encode_decode_forward.1} parent=1 // pred_region
      _
    $region121: #{encode_decode_forward.1} parent=1 // pred_fallthru
      _
    // Predicated region
    $region122: #{encode_decode_forward.1} parent=1 // pred_check
      _
    $region123: #{encode_decode_forward.1} parent=1 // pred_check_branch
      %142 = sbr.rel (0) target = $region125
    $region124: #{encode_decode_forward.1} parent=1 // pred_region
      _
    $region125: #{encode_decode_forward.1} parent=1 // pred_fallthru
      _
    // Predicated region
    $region126: #{encode_decode_forward.1} parent=1 // pred_check
      _
    $region127: #{encode_decode_forward.1} parent=1 // pred_check_branch
      %144 = sbr.rel (0) target = $region129
    $region128: #{encode_decode_forward.1} parent=1 // pred_region
      _
    $region129: #{encode_decode_forward.1} parent=1 // pred_fallthru
      _
    // Predicated region
    $region130: #{encode_decode_forward.1} parent=1 // pred_check
      _
    $region131: #{encode_decode_forward.1} parent=1 // pred_check_branch
      %146 = sbr.rel (0) target = $region133
    $region132: #{encode_decode_forward.1} parent=1 // pred_region
      _
    $region133: #{encode_decode_forward.1} parent=1 // pred_fallthru
      _
    // Predicated region
    $region134: #{encode_decode_forward.1} parent=1 // pred_check
      _
    $region135: #{encode_decode_forward.1} parent=1 // pred_check_branch
      %148 = sbr.rel (0) target = $region137
    $region136: #{encode_decode_forward.1} parent=1 // pred_region
      _
    $region137: #{encode_decode_forward.1} parent=1 // pred_fallthru
      _
    // Predicated region
    $region138: #{encode_decode_forward.1} parent=1 // pred_check
      _
    $region139: #{encode_decode_forward.1} parent=1 // pred_check_branch
      %150 = sbr.rel (0) target = $region141
    $region140: #{encode_decode_forward.1} parent=1 // pred_region
      _
    $region141: #{encode_decode_forward.1} parent=1 // pred_fallthru
      _
    // Predicated region
    $region142: #{encode_decode_forward.1} parent=1 // pred_check
      _
    $region143: #{encode_decode_forward.1} parent=1 // pred_check_branch
      %152 = sbr.rel (0) target = $region145
    $region144: #{encode_decode_forward.1} parent=1 // pred_region
      _
    $region145: #{encode_decode_forward.1} parent=1 // pred_fallthru
      _
    // Predicated region
    $region146: #{encode_decode_forward.1} parent=1 // pred_check
      _
    $region147: #{encode_decode_forward.1} parent=1 // pred_check_branch
      %154 = sbr.rel (0) target = $region149
    $region148: #{encode_decode_forward.1} parent=1 // pred_region
      _
    $region149: #{encode_decode_forward.1} parent=1 // pred_fallthru
      _
    %v155 = vld [vmem:[%s1] sm:$0xff]
    %v156 = vld [vmem:[%s1 + $0x8] sm:$0xff]
    %v157 = vld [vmem:[%s11] sm:$0xff]
    %v158 = vld [vmem:[%s11 + $0x8] sm:$0xff]
    %v159 = vld [vmem:[%s11 + $0x10] sm:$0xff]
    %v160 = vld [vmem:[%s11 + $0x18] sm:$0xff]
    %v161 = vld [vmem:[%s13] sm:$0x1]
    %v163 = vperm.slane %v161, 0
    %vm165 = vcmask 261120
    %v167 = vsel %vm165, %v155, 0
    %v170 = vsel %vm165, %v156, 0
    %172 = vmatpush.msra.mxu0 0.0
    %173 = vmatpush.msra.mxu0 0.0
    %174 = vmatpush.msra.mxu0 0.0
    %175 = vmatpush.msra.mxu0 0.0
    %176 = vmatpush.msra.mxu0 0.0
    %177 = vmatpush.msra.mxu0 0.0
    %178 = vmatpush.msra.mxu0 0.0
    %179 = vmatpush.msra.mxu0 0.0
    %180 = vmatpush.msra.mxu0 0.0
    %181 = vmatpush.msra.mxu0 0.0
    %182 = vmatpush.msra.mxu0 0.0
    %183 = vmatpush.msra.mxu0 0.0
    %184 = vmatpush.msra.mxu0 %v160
    %185 = vmatpush.msra.mxu0 %v159
    %186 = vmatpush.msra.mxu0 %v158
    %187 = vmatpush.msra.mxu0 %v157
    %188 = vmatmul.f32.gmra.mxu0 %v167
    %v189 = vpop.f32.mrf.mxu0
    %v190 = vadd.f32 %v163, %v189
    %191 = vmatmul.f32.gmra.mxu0 %v170
    %v192 = vpop.f32.mrf.mxu0
    %v193 = vadd.f32 %v163, %v192
    %194 = vdwg.mxu0
    %v195 = vld [vmem:[%s5] sm:$0xff]
    %v196 = vld [vmem:[%s5 + $0x8] sm:$0xff]
    %v197 = vmul.f32 %v190, 0.17677669
    %v198 = vmul.f32 %v193, 0.17677669
    %200 = vrot.lane.b32.xlu0 %v190, 96
    %v201 = vpop.permute.xlu0 %200
    %v203 = vsel %vm165, %v197, 0
    %v205 = vsel %vm165, %v201, 0
    %207 = vmatpush.xpose.msra.mxu0 0.0
    %208 = vmatpush.xpose.msra.mxu0 0.0
    %209 = vmatpush.xpose.msra.mxu0 0.0
    %210 = vmatpush.xpose.msra.mxu0 0.0
    %211 = vmatpush.xpose.msra.mxu0 0.0
    %212 = vmatpush.xpose.msra.mxu0 0.0
    %213 = vmatpush.xpose.msra.mxu0 0.0
    %214 = vmatpush.xpose.msra.mxu0 0.0
    %215 = vmatpush.xpose.msra.mxu0 0.0
    %216 = vmatpush.xpose.msra.mxu0 0.0
    %217 = vmatpush.xpose.msra.mxu0 0.0
    %218 = vmatpush.xpose.msra.mxu0 0.0
    %219 = vmatpush.xpose.msra.mxu0 0.0
    %220 = vmatpush.xpose.msra.mxu0 0.0
    %221 = vmatpush.xpose.msra.mxu0 0.0
    %222 = vmatpush.xpose.msra.mxu0 %v205
    %223 = vmatmul.f32.gmra.mxu0 %v203
    %v224 = vpop.f32.mrf.mxu0
    %v225 = vadd.f32 %v195, %v224
    %226 = vdwg.mxu0
    %228 = vrot.lane.b32.xlu0 %v193, 96
    %v229 = vpop.permute.xlu0 %228
    %v231 = vsel %vm165, %v198, 0
    %v233 = vsel %vm165, %v229, 0
    %235 = vmatpush.xpose.msra.mxu0 0.0
    %236 = vmatpush.xpose.msra.mxu0 0.0
    %237 = vmatpush.xpose.msra.mxu0 0.0
    %238 = vmatpush.xpose.msra.mxu0 0.0
    %239 = vmatpush.xpose.msra.mxu0 0.0
    %240 = vmatpush.xpose.msra.mxu0 0.0
    %241 = vmatpush.xpose.msra.mxu0 0.0
    %242 = vmatpush.xpose.msra.mxu0 0.0
    %243 = vmatpush.xpose.msra.mxu0 0.0
    %244 = vmatpush.xpose.msra.mxu0 0.0
    %245 = vmatpush.xpose.msra.mxu0 0.0
    %246 = vmatpush.xpose.msra.mxu0 0.0
    %247 = vmatpush.xpose.msra.mxu0 0.0
    %248 = vmatpush.xpose.msra.mxu0 0.0
    %249 = vmatpush.xpose.msra.mxu0 0.0
    %250 = vmatpush.xpose.msra.mxu0 %v233
    %251 = vmatmul.f32.gmra.mxu0 %v231
    %v252 = vpop.f32.mrf.mxu0
    %v253 = vadd.f32 %v196, %v252
    %254 = vdwg.mxu0
    %vm255 = vcmask 64512
    %v256 = vsel %vm255, %v225, -inf
    %257 = vmax.xlane.f32.xlu0 %v256
    %v258 = vpop.xlane.xlu0 %257
    %v259 = vsel %vm255, %v253, -inf
    %260 = vmax.xlane.f32.xlu0 %v259
    %v261 = vpop.xlane.xlu0 %260
    %v262 = vsub.f32 %v225, %v258
    %v263 = vsub.f32 %v253, %v261
    %v264 = vmul.f32 %v262, 1.442695
    %v265 = vpow.pop %v264
    %v266 = vmul.f32 %v263, 1.442695
    %v267 = vpow.pop %v266
    %v268 = vsel %vm255, %v265, 0.0
    %269 = vadd.xlane.f32.xlu0 %v268
    %v270 = vpop.xlane.xlu0 %269
    %v271 = vsel %vm255, %v267, 0.0
    %272 = vadd.xlane.f32.xlu0 %v271
    %v273 = vpop.xlane.xlu0 %272
    %v274 = vrcp.pop %v270
    %v275 = vrcp.pop %v273
    %v276 = vmul.f32 %v265, %v274
    %v277 = vmul.f32 %v267, %v275
    %278 = vrot.lane.b32.xlu0 %v190, 64
    %v279 = vpop.permute.xlu0 %278
    %v282 = vsel %vm255, %v276, 0
    %284 = vmatpush.msra.mxu0 0.0
    %285 = vmatpush.msra.mxu0 0.0
    %286 = vmatpush.msra.mxu0 0.0
    %287 = vmatpush.msra.mxu0 0.0
    %288 = vmatpush.msra.mxu0 0.0
    %289 = vmatpush.msra.mxu0 0.0
    %290 = vmatpush.msra.mxu0 0.0
    %291 = vmatpush.msra.mxu0 0.0
    %292 = vmatpush.msra.mxu0 0.0
    %293 = vmatpush.msra.mxu0 0.0
    %294 = vmatpush.msra.mxu0 0.0
    %295 = vmatpush.msra.mxu0 0.0
    %296 = vmatpush.msra.mxu0 0.0
    %297 = vmatpush.msra.mxu0 0.0
    %298 = vmatpush.msra.mxu0 0.0
    %299 = vmatpush.msra.mxu0 %v279
    %300 = vmatmul.f32.gmra.mxu0 %v282
    %v301 = vpop.f32.mrf.mxu0
    %v302 = vadd.f32 0.0, %v301
    %303 = vdwg.mxu0
    %304 = vrot.lane.b32.xlu0 %v193, 64
    %v305 = vpop.permute.xlu0 %304
    %v308 = vsel %vm255, %v277, 0
    %310 = vmatpush.msra.mxu0 0.0
    %311 = vmatpush.msra.mxu0 0.0
    %312 = vmatpush.msra.mxu0 0.0
    %313 = vmatpush.msra.mxu0 0.0
    %314 = vmatpush.msra.mxu0 0.0
    %315 = vmatpush.msra.mxu0 0.0
    %316 = vmatpush.msra.mxu0 0.0
    %317 = vmatpush.msra.mxu0 0.0
    %318 = vmatpush.msra.mxu0 0.0
    %319 = vmatpush.msra.mxu0 0.0
    %320 = vmatpush.msra.mxu0 0.0
    %321 = vmatpush.msra.mxu0 0.0
    %322 = vmatpush.msra.mxu0 0.0
    %323 = vmatpush.msra.mxu0 0.0
    %324 = vmatpush.msra.mxu0 0.0
    %325 = vmatpush.msra.mxu0 %v305
    %326 = vmatmul.f32.gmra.mxu0 %v308
    %v327 = vpop.f32.mrf.mxu0
    %v328 = vadd.f32 0.0, %v327
    %329 = vdwg.mxu0
    %v330 = vld [vmem:[%s15] sm:$0xff]
    %v331 = vld [vmem:[%s15 + $0x8] sm:$0xff]
    %v332 = vld [vmem:[%s15 + $0x10] sm:$0xff]
    %v333 = vld [vmem:[%s15 + $0x18] sm:$0xff]
    %v334 = vld [vmem:[%s17] sm:$0x1]
    %v336 = vperm.slane %v334, 0
    %v339 = vsel %vm165, %v302, 0
    %v342 = vsel %vm165, %v328, 0
    %344 = vmatpush.msra.mxu0 0.0
    %345 = vmatpush.msra.mxu0 0.0
    %346 = vmatpush.msra.mxu0 0.0
    %347 = vmatpush.msra.mxu0 0.0
    %348 = vmatpush.msra.mxu0 0.0
    %349 = vmatpush.msra.mxu0 0.0
    %350 = vmatpush.msra.mxu0 0.0
    %351 = vmatpush.msra.mxu0 0.0
    %352 = vmatpush.msra.mxu0 0.0
    %353 = vmatpush.msra.mxu0 0.0
    %354 = vmatpush.msra.mxu0 0.0
    %355 = vmatpush.msra.mxu0 0.0
    %356 = vmatpush.msra.mxu0 %v333
    %357 = vmatpush.msra.mxu0 %v332
    %358 = vmatpush.msra.mxu0 %v331
    %359 = vmatpush.msra.mxu0 %v330
    %360 = vmatmul.f32.gmra.mxu0 %v339
    %v361 = vpop.f32.mrf.mxu0
    %v362 = vadd.f32 %v336, %v361
    %363 = vmatmul.f32.gmra.mxu0 %v342
    %v364 = vpop.f32.mrf.mxu0
    %v365 = vadd.f32 %v336, %v364
    %366 = vdwg.mxu0
    %v367 = vadd.f32 %v155, %v362
    %v368 = vadd.f32 %v156, %v365
    %v369 = vld [vmem:[%s19] sm:$0x1]
    %v370 = vld [vmem:[%s21] sm:$0x1]
    %v371 = vsel %vm165, %v367, 0.0
    %372 = vadd.xlane.f32.xlu0 %v371
    %v373 = vpop.xlane.xlu0 %372
    %v374 = vsel %vm165, %v368, 0.0
    %375 = vadd.xlane.f32.xlu0 %v374
    %v376 = vpop.xlane.xlu0 %375
    %v377 = vrcp.pop 32.0
    %v378 = vmul.f32 32.0, %v377
    %v379 = vsub.f32 1.0, %v378
    %v380 = vmul.f32 %v377, %v379
    %v381 = vadd.f32 %v377, %v380
    %vm382 = vweird.f32 %v377
    %v383 = vsel %vm382, %v377, %v381
    %v384 = vmul.f32 %v373, %v383
    %v385 = vmul.f32 %v376, %v383
    %v386 = vsub.f32 %v367, %v384
    %v387 = vsub.f32 %v368, %v385
    %v388 = vmul.f32 %v386, %v386
    %v389 = vmul.f32 %v387, %v387
    %v390 = vsel %vm165, %v388, 0.0
    %391 = vadd.xlane.f32.xlu0 %v390
    %v392 = vpop.xlane.xlu0 %391
    %v393 = vsel %vm165, %v389, 0.0
    %394 = vadd.xlane.f32.xlu0 %v393
    %v395 = vpop.xlane.xlu0 %394
    %v396 = vmul.f32 %v392, %v383
    %v397 = vmul.f32 %v395, %v383
    %v398 = vadd.f32 %v396, 1e-06
    %v399 = vadd.f32 %v397, 1e-06
    %v400 = vrsqrt.pop %v398
    %v401 = vmul.f32 %v400, %v398
    %v402 = vmul.f32 %v401, %v400
    %v403 = vmul.f32 0.5, %v402
    %v404 = vsub.f32 1.5, %v403
    %v405 = vmul.f32 %v400, %v404
    %vm406 = vweird.f32 %v398
    %vm407 = vweird.f32 %v400
    %vm408 = vmor %vm406, %vm407
    %v409 = vsel %vm408, %v400, %v405
    %v410 = vrsqrt.pop %v399
    %v411 = vmul.f32 %v410, %v399
    %v412 = vmul.f32 %v411, %v410
    %v413 = vmul.f32 0.5, %v412
    %v414 = vsub.f32 1.5, %v413
    %v415 = vmul.f32 %v410, %v414
    %vm416 = vweird.f32 %v399
    %vm417 = vweird.f32 %v410
    %vm418 = vmor %vm416, %vm417
    %v419 = vsel %vm418, %v410, %v415
    %v420 = vmul.f32 %v386, %v409
    %v421 = vmul.f32 %v387, %v419
    %v423 = vperm.slane %v369, 0
    %v425 = vmul.f32 %v420, %v423
    %v426 = vmul.f32 %v421, %v423
    %v428 = vperm.slane %v370, 0
    %v430 = vadd.f32 %v425, %v428
    %v431 = vadd.f32 %v426, %v428
    %v432 = vld [vmem:[%s23] sm:$0xff]
    %v433 = vld [vmem:[%s23 + $0x8] sm:$0xff]
    %v434 = vld [vmem:[%s23 + $0x10] sm:$0xff]
    %v435 = vld [vmem:[%s23 + $0x18] sm:$0xff]
    %v436 = vld [vmem:[%s25] sm:$0x1]
    %v438 = vperm.slane %v436, 0
    %v441 = vsel %vm165, %v430, 0
    %v444 = vsel %vm165, %v431, 0
    %446 = vmatpush.msra.mxu0 0.0
    %447 = vmatpush.msra.mxu0 0.0
    %448 = vmatpush.msra.mxu0 0.0
    %449 = vmatpush.msra.mxu0 0.0
    %450 = vmatpush.msra.mxu0 0.0
    %451 = vmatpush.msra.mxu0 0.0
    %452 = vmatpush.msra.mxu0 0.0
    %453 = vmatpush.msra.mxu0 0.0
    %454 = vmatpush.msra.mxu0 0.0
    %455 = vmatpush.msra.mxu0 0.0
    %456 = vmatpush.msra.mxu0 0.0
    %457 = vmatpush.msra.mxu0 0.0
    %458 = vmatpush.msra.mxu0 %v435
    %459 = vmatpush.msra.mxu0 %v434
    %460 = vmatpush.msra.mxu0 %v433
    %461 = vmatpush.msra.mxu0 %v432
    %462 = vmatmul.f32.gmra.mxu0 %v441
    %v463 = vpop.f32.mrf.mxu0
    %v464 = vadd.f32 %v438, %v463
    %465 = vmatmul.f32.gmra.mxu0 %v444
    %v466 = vpop.f32.mrf.mxu0
    %v467 = vadd.f32 %v438, %v466
    %468 = vdwg.mxu0
    %v469 = vmax.f32 %v464, 0.0
    %v470 = vmax.f32 %v467, 0.0
    %v471 = vld [vmem:[%s27] sm:$0xff]
    %v472 = vld [vmem:[%s27 + $0x8] sm:$0xff]
    %v473 = vld [vmem:[%s27 + $0x10] sm:$0xff]
    %v474 = vld [vmem:[%s27 + $0x18] sm:$0xff]
    %v475 = vld [vmem:[%s27 + $0x20] sm:$0xff]
    %v476 = vld [vmem:[%s27 + $0x28] sm:$0xff]
    %v477 = vld [vmem:[%s27 + $0x30] sm:$0xff]
    %v478 = vld [vmem:[%s27 + $0x38] sm:$0xff]
    %v479 = vld [vmem:[%s29] sm:$0x1]
    %v481 = vperm.slane %v479, 0
    %vm483 = vcmask 523264
    %v485 = vsel %vm483, %v469, 0
    %v488 = vsel %vm483, %v470, 0
    %490 = vmatpush.msra.mxu0 0.0
    %491 = vmatpush.msra.mxu0 0.0
    %492 = vmatpush.msra.mxu0 0.0
    %493 = vmatpush.msra.mxu0 0.0
    %494 = vmatpush.msra.mxu0 0.0
    %495 = vmatpush.msra.mxu0 0.0
    %496 = vmatpush.msra.mxu0 0.0
    %497 = vmatpush.msra.mxu0 0.0
    %498 = vmatpush.msra.mxu0 %v478
    %499 = vmatpush.msra.mxu0 %v477
    %500 = vmatpush.msra.mxu0 %v476
    %501 = vmatpush.msra.mxu0 %v475
    %502 = vmatpush.msra.mxu0 %v474
    %503 = vmatpush.msra.mxu0 %v473
    %504 = vmatpush.msra.mxu0 %v472
    %505 = vmatpush.msra.mxu0 %v471
    %506 = vmatmul.f32.gmra.mxu0 %v485
    %v507 = vpop.f32.mrf.mxu0
    %v508 = vadd.f32 %v481, %v507
    %509 = vmatmul.f32.gmra.mxu0 %v488
    %v510 = vpop.f32.mrf.mxu0
    %v511 = vadd.f32 %v481, %v510
    %512 = vdwg.mxu0
    %v513 = vadd.f32 %v430, %v508
    %v514 = vadd.f32 %v431, %v511
    %v515 = vld [vmem:[%s31] sm:$0x1]
    %v516 = vld [vmem:[%s33] sm:$0x1]
    %v517 = vsel %vm165, %v513, 0.0
    %518 = vadd.xlane.f32.xlu0 %v517
    %v519 = vpop.xlane.xlu0 %518
    %v520 = vsel %vm165, %v514, 0.0
    %521 = vadd.xlane.f32.xlu0 %v520
    %v522 = vpop.xlane.xlu0 %521
    %v523 = vmul.f32 %v519, %v383
    %v524 = vmul.f32 %v522, %v383
    %v525 = vsub.f32 %v513, %v523
    %v526 = vsub.f32 %v514, %v524
    %v527 = vmul.f32 %v525, %v525
    %v528 = vmul.f32 %v526, %v526
    %v529 = vsel %vm165, %v527, 0.0
    %530 = vadd.xlane.f32.xlu0 %v529
    %v531 = vpop.xlane.xlu0 %530
    %v532 = vsel %vm165, %v528, 0.0
    %533 = vadd.xlane.f32.xlu0 %v532
    %v534 = vpop.xlane.xlu0 %533
    %v535 = vmul.f32 %v531, %v383
    %v536 = vmul.f32 %v534, %v383
    %v537 = vadd.f32 %v535, 1e-06
    %v538 = vadd.f32 %v536, 1e-06
    %v539 = vrsqrt.pop %v537
    %v540 = vmul.f32 %v539, %v537
    %v541 = vmul.f32 %v540, %v539
    %v542 = vmul.f32 0.5, %v541
    %v543 = vsub.f32 1.5, %v542
    %v544 = vmul.f32 %v539, %v543
    %vm545 = vweird.f32 %v537
    %vm546 = vweird.f32 %v539
    %vm547 = vmor %vm545, %vm546
    %v548 = vsel %vm547, %v539, %v544
    %v549 = vrsqrt.pop %v538
    %v550 = vmul.f32 %v549, %v538
    %v551 = vmul.f32 %v550, %v549
    %v552 = vmul.f32 0.5, %v551
    %v553 = vsub.f32 1.5, %v552
    %v554 = vmul.f32 %v549, %v553
    %vm555 = vweird.f32 %v538
    %vm556 = vweird.f32 %v549
    %vm557 = vmor %vm555, %vm556
    %v558 = vsel %vm557, %v549, %v554
    %v559 = vmul.f32 %v525, %v548
    %v560 = vmul.f32 %v526, %v558
    %v562 = vperm.slane %v515, 0
    %v564 = vmul.f32 %v559, %v562
    %v565 = vmul.f32 %v560, %v562
    %v567 = vperm.slane %v516, 0
    %v569 = vadd.f32 %v564, %v567
    %v570 = vadd.f32 %v565, %v567
    %v571 = vld [vmem:[%s3] sm:$0xff]
    %v572 = vld [vmem:[%s3 + $0x8] sm:$0xff]
    %v573 = vld [vmem:[%s35] sm:$0xff]
    %v574 = vld [vmem:[%s35 + $0x8] sm:$0xff]
    %v575 = vld [vmem:[%s35 + $0x10] sm:$0xff]
    %v576 = vld [vmem:[%s35 + $0x18] sm:$0xff]
    %v577 = vld [vmem:[%s37] sm:$0x1]
    %v579 = vperm.slane %v577, 0
    %v582 = vsel %vm165, %v571, 0
    %v585 = vsel %vm165, %v572, 0
    %587 = vmatpush.msra.mxu0 0.0
    %588 = vmatpush.msra.mxu0 0.0
    %589 = vmatpush.msra.mxu0 0.0
    %590 = vmatpush.msra.mxu0 0.0
    %591 = vmatpush.msra.mxu0 0.0
    %592 = vmatpush.msra.mxu0 0.0
    %593 = vmatpush.msra.mxu0 0.0
    %594 = vmatpush.msra.mxu0 0.0
    %595 = vmatpush.msra.mxu0 0.0
    %596 = vmatpush.msra.mxu0 0.0
    %597 = vmatpush.msra.mxu0 0.0
    %598 = vmatpush.msra.mxu0 0.0
    %599 = vmatpush.msra.mxu0 %v576
    %600 = vmatpush.msra.mxu0 %v575
    %601 = vmatpush.msra.mxu0 %v574
    %602 = vmatpush.msra.mxu0 %v573
    %603 = vmatmul.f32.gmra.mxu0 %v582
    %v604 = vpop.f32.mrf.mxu0
    %v605 = vadd.f32 %v579, %v604
    %606 = vmatmul.f32.gmra.mxu0 %v585
    %v607 = vpop.f32.mrf.mxu0
    %v608 = vadd.f32 %v579, %v607
    %609 = vdwg.mxu0
    %v610 = vld [vmem:[%s7] sm:$0xff]
    %v611 = vld [vmem:[%s7 + $0x8] sm:$0xff]
    %v612 = vmul.f32 %v605, 0.17677669
    %v613 = vmul.f32 %v608, 0.17677669
    %615 = vrot.lane.b32.xlu0 %v605, 96
    %v616 = vpop.permute.xlu0 %615
    %v618 = vsel %vm165, %v612, 0
    %v620 = vsel %vm165, %v616, 0
    %622 = vmatpush.xpose.msra.mxu0 0.0
    %623 = vmatpush.xpose.msra.mxu0 0.0
    %624 = vmatpush.xpose.msra.mxu0 0.0
    %625 = vmatpush.xpose.msra.mxu0 0.0
    %626 = vmatpush.xpose.msra.mxu0 0.0
    %627 = vmatpush.xpose.msra.mxu0 0.0
    %628 = vmatpush.xpose.msra.mxu0 0.0
    %629 = vmatpush.xpose.msra.mxu0 0.0
    %630 = vmatpush.xpose.msra.mxu0 0.0
    %631 = vmatpush.xpose.msra.mxu0 0.0
    %632 = vmatpush.xpose.msra.mxu0 0.0
    %633 = vmatpush.xpose.msra.mxu0 0.0
    %634 = vmatpush.xpose.msra.mxu0 0.0
    %635 = vmatpush.xpose.msra.mxu0 0.0
    %636 = vmatpush.xpose.msra.mxu0 0.0
    %637 = vmatpush.xpose.msra.mxu0 %v620
    %638 = vmatmul.f32.gmra.mxu0 %v618
    %v639 = vpop.f32.mrf.mxu0
    %v640 = vadd.f32 %v610, %v639
    %641 = vdwg.mxu0
    %643 = vrot.lane.b32.xlu0 %v608, 96
    %v644 = vpop.permute.xlu0 %643
    %v646 = vsel %vm165, %v613, 0
    %v648 = vsel %vm165, %v644, 0
    %650 = vmatpush.xpose.msra.mxu0 0.0
    %651 = vmatpush.xpose.msra.mxu0 0.0
    %652 = vmatpush.xpose.msra.mxu0 0.0
    %653 = vmatpush.xpose.msra.mxu0 0.0
    %654 = vmatpush.xpose.msra.mxu0 0.0
    %655 = vmatpush.xpose.msra.mxu0 0.0
    %656 = vmatpush.xpose.msra.mxu0 0.0
    %657 = vmatpush.xpose.msra.mxu0 0.0
    %658 = vmatpush.xpose.msra.mxu0 0.0
    %659 = vmatpush.xpose.msra.mxu0 0.0
    %660 = vmatpush.xpose.msra.mxu0 0.0
    %661 = vmatpush.xpose.msra.mxu0 0.0
    %662 = vmatpush.xpose.msra.mxu0 0.0
    %663 = vmatpush.xpose.msra.mxu0 0.0
    %664 = vmatpush.xpose.msra.mxu0 0.0
    %665 = vmatpush.xpose.msra.mxu0 %v648
    %666 = vmatmul.f32.gmra.mxu0 %v646
    %v667 = vpop.f32.mrf.mxu0
    %v668 = vadd.f32 %v611, %v667
    %669 = vdwg.mxu0
    %v670 = vsel %vm255, %v640, -inf
    %671 = vmax.xlane.f32.xlu0 %v670
    %v672 = vpop.xlane.xlu0 %671
    %v673 = vsel %vm255, %v668, -inf
    %674 = vmax.xlane.f32.xlu0 %v673
    %v675 = vpop.xlane.xlu0 %674
    %v676 = vsub.f32 %v640, %v672
    %v677 = vsub.f32 %v668, %v675
    %v678 = vmul.f32 %v676, 1.442695
    %v679 = vpow.pop %v678
    %v680 = vmul.f32 %v677, 1.442695
    %v681 = vpow.pop %v680
    %v682 = vsel %vm255, %v679, 0.0
    %683 = vadd.xlane.f32.xlu0 %v682
    %v684 = vpop.xlane.xlu0 %683
    %v685 = vsel %vm255, %v681, 0.0
    %686 = vadd.xlane.f32.xlu0 %v685
    %v687 = vpop.xlane.xlu0 %686
    %v688 = vrcp.pop %v684
    %v689 = vrcp.pop %v687
    %v690 = vmul.f32 %v679, %v688
    %v691 = vmul.f32 %v681, %v689
    %692 = vrot.lane.b32.xlu0 %v605, 64
    %v693 = vpop.permute.xlu0 %692
    %v696 = vsel %vm255, %v690, 0
    %698 = vmatpush.msra.mxu0 0.0
    %699 = vmatpush.msra.mxu0 0.0
    %700 = vmatpush.msra.mxu0 0.0
    %701 = vmatpush.msra.mxu0 0.0
    %702 = vmatpush.msra.mxu0 0.0
    %703 = vmatpush.msra.mxu0 0.0
    %704 = vmatpush.msra.mxu0 0.0
    %705 = vmatpush.msra.mxu0 0.0
    %706 = vmatpush.msra.mxu0 0.0
    %707 = vmatpush.msra.mxu0 0.0
    %708 = vmatpush.msra.mxu0 0.0
    %709 = vmatpush.msra.mxu0 0.0
    %710 = vmatpush.msra.mxu0 0.0
    %711 = vmatpush.msra.mxu0 0.0
    %712 = vmatpush.msra.mxu0 0.0
    %713 = vmatpush.msra.mxu0 %v693
    %714 = vmatmul.f32.gmra.mxu0 %v696
    %v715 = vpop.f32.mrf.mxu0
    %v716 = vadd.f32 0.0, %v715
    %717 = vdwg.mxu0
    %718 = vrot.lane.b32.xlu0 %v608, 64
    %v719 = vpop.permute.xlu0 %718
    %v722 = vsel %vm255, %v691, 0
    %724 = vmatpush.msra.mxu0 0.0
    %725 = vmatpush.msra.mxu0 0.0
    %726 = vmatpush.msra.mxu0 0.0
    %727 = vmatpush.msra.mxu0 0.0
    %728 = vmatpush.msra.mxu0 0.0
    %729 = vmatpush.msra.mxu0 0.0
    %730 = vmatpush.msra.mxu0 0.0
    %731 = vmatpush.msra.mxu0 0.0
    %732 = vmatpush.msra.mxu0 0.0
    %733 = vmatpush.msra.mxu0 0.0
    %734 = vmatpush.msra.mxu0 0.0
    %735 = vmatpush.msra.mxu0 0.0
    %736 = vmatpush.msra.mxu0 0.0
    %737 = vmatpush.msra.mxu0 0.0
    %738 = vmatpush.msra.mxu0 0.0
    %739 = vmatpush.msra.mxu0 %v719
    %740 = vmatmul.f32.gmra.mxu0 %v722
    %v741 = vpop.f32.mrf.mxu0
    %v742 = vadd.f32 0.0, %v741
    %743 = vdwg.mxu0
    %v744 = vld [vmem:[%s39] sm:$0xff]
    %v745 = vld [vmem:[%s39 + $0x8] sm:$0xff]
    %v746 = vld [vmem:[%s39 + $0x10] sm:$0xff]
    %v747 = vld [vmem:[%s39 + $0x18] sm:$0xff]
    %v748 = vld [vmem:[%s41] sm:$0x1]
    %v750 = vperm.slane %v748, 0
    %v753 = vsel %vm165, %v716, 0
    %v756 = vsel %vm165, %v742, 0
    %758 = vmatpush.msra.mxu0 0.0
    %759 = vmatpush.msra.mxu0 0.0
    %760 = vmatpush.msra.mxu0 0.0
    %761 = vmatpush.msra.mxu0 0.0
    %762 = vmatpush.msra.mxu0 0.0
    %763 = vmatpush.msra.mxu0 0.0
    %764 = vmatpush.msra.mxu0 0.0
    %765 = vmatpush.msra.mxu0 0.0
    %766 = vmatpush.msra.mxu0 0.0
    %767 = vmatpush.msra.mxu0 0.0
    %768 = vmatpush.msra.mxu0 0.0
    %769 = vmatpush.msra.mxu0 0.0
    %770 = vmatpush.msra.mxu0 %v747
    %771 = vmatpush.msra.mxu0 %v746
    %772 = vmatpush.msra.mxu0 %v745
    %773 = vmatpush.msra.mxu0 %v744
    %774 = vmatmul.f32.gmra.mxu0 %v753
    %v775 = vpop.f32.mrf.mxu0
    %v776 = vadd.f32 %v750, %v775
    %777 = vmatmul.f32.gmra.mxu0 %v756
    %v778 = vpop.f32.mrf.mxu0
    %v779 = vadd.f32 %v750, %v778
    %780 = vdwg.mxu0
    %v781 = vadd.f32 %v571, %v776
    %v782 = vadd.f32 %v572, %v779
    %v783 = vld [vmem:[%s43] sm:$0x1]
    %v784 = vld [vmem:[%s45] sm:$0x1]
    %v785 = vsel %vm165, %v781, 0.0
    %786 = vadd.xlane.f32.xlu0 %v785
    %v787 = vpop.xlane.xlu0 %786
    %v788 = vsel %vm165, %v782, 0.0
    %789 = vadd.xlane.f32.xlu0 %v788
    %v790 = vpop.xlane.xlu0 %789
    %v791 = vmul.f32 %v787, %v383
    %v792 = vmul.f32 %v790, %v383
    %v793 = vsub.f32 %v781, %v791
    %v794 = vsub.f32 %v782, %v792
    %v795 = vmul.f32 %v793, %v793
    %v796 = vmul.f32 %v794, %v794
    %v797 = vsel %vm165, %v795, 0.0
    %798 = vadd.xlane.f32.xlu0 %v797
    %v799 = vpop.xlane.xlu0 %798
    %v800 = vsel %vm165, %v796, 0.0
    %801 = vadd.xlane.f32.xlu0 %v800
    %v802 = vpop.xlane.xlu0 %801
    %v803 = vmul.f32 %v799, %v383
    %v804 = vmul.f32 %v802, %v383
    %v805 = vadd.f32 %v803, 1e-06
    %v806 = vadd.f32 %v804, 1e-06
    %v807 = vrsqrt.pop %v805
    %v808 = vmul.f32 %v807, %v805
    %v809 = vmul.f32 %v808, %v807
    %v810 = vmul.f32 0.5, %v809
    %v811 = vsub.f32 1.5, %v810
    %v812 = vmul.f32 %v807, %v811
    %vm813 = vweird.f32 %v805
    %vm814 = vweird.f32 %v807
    %vm815 = vmor %vm813, %vm814
    %v816 = vsel %vm815, %v807, %v812
    %v817 = vrsqrt.pop %v806
    %v818 = vmul.f32 %v817, %v806
    %v819 = vmul.f32 %v818, %v817
    %v820 = vmul.f32 0.5, %v819
    %v821 = vsub.f32 1.5, %v820
    %v822 = vmul.f32 %v817, %v821
    %vm823 = vweird.f32 %v806
    %vm824 = vweird.f32 %v817
    %vm825 = vmor %vm823, %vm824
    %v826 = vsel %vm825, %v817, %v822
    %v827 = vmul.f32 %v793, %v816
    %v828 = vmul.f32 %v794, %v826
    %v830 = vperm.slane %v783, 0
    %v832 = vmul.f32 %v827, %v830
    %v833 = vmul.f32 %v828, %v830
    %v835 = vperm.slane %v784, 0
    %v837 = vadd.f32 %v832, %v835
    %v838 = vadd.f32 %v833, %v835
    %v839 = vld [vmem:[%s47] sm:$0xff]
    %v840 = vld [vmem:[%s47 + $0x8] sm:$0xff]
    %v841 = vld [vmem:[%s47 + $0x10] sm:$0xff]
    %v842 = vld [vmem:[%s47 + $0x18] sm:$0xff]
    %v843 = vld [vmem:[%s49] sm:$0x1]
    %v845 = vperm.slane %v843, 0
    %v848 = vsel %vm165, %v837, 0
    %v851 = vsel %vm165, %v838, 0
    %853 = vmatpush.msra.mxu0 0.0
    %854 = vmatpush.msra.mxu0 0.0
    %855 = vmatpush.msra.mxu0 0.0
    %856 = vmatpush.msra.mxu0 0.0
    %857 = vmatpush.msra.mxu0 0.0
    %858 = vmatpush.msra.mxu0 0.0
    %859 = vmatpush.msra.mxu0 0.0
    %860 = vmatpush.msra.mxu0 0.0
    %861 = vmatpush.msra.mxu0 0.0
    %862 = vmatpush.msra.mxu0 0.0
    %863 = vmatpush.msra.mxu0 0.0
    %864 = vmatpush.msra.mxu0 0.0
    %865 = vmatpush.msra.mxu0 %v842
    %866 = vmatpush.msra.mxu0 %v841
    %867 = vmatpush.msra.mxu0 %v840
    %868 = vmatpush.msra.mxu0 %v839
    %869 = vmatmul.f32.gmra.mxu0 %v848
    %v870 = vpop.f32.mrf.mxu0
    %v871 = vadd.f32 %v845, %v870
    %872 = vmatmul.f32.gmra.mxu0 %v851
    %v873 = vpop.f32.mrf.mxu0
    %v874 = vadd.f32 %v845, %v873
    %875 = vdwg.mxu0
    %v876 = vld [vmem:[%s51] sm:$0xff]
    %v877 = vld [vmem:[%s51 + $0x8] sm:$0xff]
    %v878 = vld [vmem:[%s51 + $0x10] sm:$0xff]
    %v879 = vld [vmem:[%s51 + $0x18] sm:$0xff]
    %v880 = vld [vmem:[%s53] sm:$0x1]
    %v882 = vperm.slane %v880, 0
    %v885 = vsel %vm165, %v569, 0
    %v888 = vsel %vm165, %v570, 0
    %890 = vmatpush.msra.mxu0 0.0
    %891 = vmatpush.msra.mxu0 0.0
    %892 = vmatpush.msra.mxu0 0.0
    %893 = vmatpush.msra.mxu0 0.0
    %894 = vmatpush.msra.mxu0 0.0
    %895 = vmatpush.msra.mxu0 0.0
    %896 = vmatpush.msra.mxu0 0.0
    %897 = vmatpush.msra.mxu0 0.0
    %898 = vmatpush.msra.mxu0 0.0
    %899 = vmatpush.msra.mxu0 0.0
    %900 = vmatpush.msra.mxu0 0.0
    %901 = vmatpush.msra.mxu0 0.0
    %902 = vmatpush.msra.mxu0 %v879
    %903 = vmatpush.msra.mxu0 %v878
    %904 = vmatpush.msra.mxu0 %v877
    %905 = vmatpush.msra.mxu0 %v876
    %906 = vmatmul.f32.gmra.mxu0 %v885
    %v907 = vpop.f32.mrf.mxu0
    %v908 = vadd.f32 %v882, %v907
    %909 = vmatmul.f32.gmra.mxu0 %v888
    %v910 = vpop.f32.mrf.mxu0
    %v911 = vadd.f32 %v882, %v910
    %912 = vdwg.mxu0
    %v913 = vld [vmem:[%s9] sm:$0xff]
    %v914 = vld [vmem:[%s9 + $0x8] sm:$0xff]
    %v915 = vmul.f32 %v871, 0.17677669
    %v916 = vmul.f32 %v874, 0.17677669
    %v918 = vsel %vm165, %v915, 0
    %v921 = vsel %vm165, %v908, 0
    %923 = vmatpush.xpose.msra.mxu0 0.0
    %924 = vmatpush.xpose.msra.mxu0 0.0
    %925 = vmatpush.xpose.msra.mxu0 0.0
    %926 = vmatpush.xpose.msra.mxu0 0.0
    %927 = vmatpush.xpose.msra.mxu0 0.0
    %928 = vmatpush.xpose.msra.mxu0 0.0
    %929 = vmatpush.xpose.msra.mxu0 0.0
    %930 = vmatpush.xpose.msra.mxu0 0.0
    %931 = vmatpush.xpose.msra.mxu0 0.0
    %932 = vmatpush.xpose.msra.mxu0 0.0
    %933 = vmatpush.xpose.msra.mxu0 0.0
    %934 = vmatpush.xpose.msra.mxu0 0.0
    %935 = vmatpush.xpose.msra.mxu0 0.0
    %936 = vmatpush.xpose.msra.mxu0 0.0
    %937 = vmatpush.xpose.msra.mxu0 0.0
    %938 = vmatpush.xpose.msra.mxu0 %v921
    %939 = vmatmul.f32.gmra.mxu0 %v918
    %v940 = vpop.f32.mrf.mxu0
    %v941 = vadd.f32 %v913, %v940
    %942 = vdwg.mxu0
    %v944 = vsel %vm165, %v916, 0
    %v947 = vsel %vm165, %v911, 0
    %949 = vmatpush.xpose.msra.mxu0 0.0
    %950 = vmatpush.xpose.msra.mxu0 0.0
    %951 = vmatpush.xpose.msra.mxu0 0.0
    %952 = vmatpush.xpose.msra.mxu0 0.0
    %953 = vmatpush.xpose.msra.mxu0 0.0
    %954 = vmatpush.xpose.msra.mxu0 0.0
    %955 = vmatpush.xpose.msra.mxu0 0.0
    %956 = vmatpush.xpose.msra.mxu0 0.0
    %957 = vmatpush.xpose.msra.mxu0 0.0
    %958 = vmatpush.xpose.msra.mxu0 0.0
    %959 = vmatpush.xpose.msra.mxu0 0.0
    %960 = vmatpush.xpose.msra.mxu0 0.0
    %961 = vmatpush.xpose.msra.mxu0 0.0
    %962 = vmatpush.xpose.msra.mxu0 0.0
    %963 = vmatpush.xpose.msra.mxu0 0.0
    %964 = vmatpush.xpose.msra.mxu0 %v947
    %965 = vmatmul.f32.gmra.mxu0 %v944
    %v966 = vpop.f32.mrf.mxu0
    %v967 = vadd.f32 %v914, %v966
    %968 = vdwg.mxu0
    %v969 = vsel %vm255, %v941, -inf
    %970 = vmax.xlane.f32.xlu0 %v969
    %v971 = vpop.xlane.xlu0 %970
    %v972 = vsel %vm255, %v967, -inf
    %973 = vmax.xlane.f32.xlu0 %v972
    %v974 = vpop.xlane.xlu0 %973
    %v975 = vsub.f32 %v941, %v971
    %v976 = vsub.f32 %v967, %v974
    %v977 = vmul.f32 %v975, 1.442695
    %v978 = vpow.pop %v977
    %v979 = vmul.f32 %v976, 1.442695
    %v980 = vpow.pop %v979
    %v981 = vsel %vm255, %v978, 0.0
    %982 = vadd.xlane.f32.xlu0 %v981
    %v983 = vpop.xlane.xlu0 %982
    %v984 = vsel %vm255, %v980, 0.0
    %985 = vadd.xlane.f32.xlu0 %v984
    %v986 = vpop.xlane.xlu0 %985
    %v987 = vrcp.pop %v983
    %v988 = vrcp.pop %v986
    %v989 = vmul.f32 %v978, %v987
    %v990 = vmul.f32 %v980, %v988
    %991 = vrot.lane.b32.xlu0 %v908, 96
    %v992 = vpop.permute.xlu0 %991
    %v995 = vsel %vm255, %v989, 0
    %997 = vmatpush.msra.mxu0 0.0
    %998 = vmatpush.msra.mxu0 0.0
    %999 = vmatpush.msra.mxu0 0.0
    %1000 = vmatpush.msra.mxu0 0.0
    %1001 = vmatpush.msra.mxu0 0.0
    %1002 = vmatpush.msra.mxu0 0.0
    %1003 = vmatpush.msra.mxu0 0.0
    %1004 = vmatpush.msra.mxu0 0.0
    %1005 = vmatpush.msra.mxu0 0.0
    %1006 = vmatpush.msra.mxu0 0.0
    %1007 = vmatpush.msra.mxu0 0.0
    %1008 = vmatpush.msra.mxu0 0.0
    %1009 = vmatpush.msra.mxu0 0.0
    %1010 = vmatpush.msra.mxu0 0.0
    %1011 = vmatpush.msra.mxu0 0.0
    %1012 = vmatpush.msra.mxu0 %v992
    %1013 = vmatmul.f32.gmra.mxu0 %v995
    %v1014 = vpop.f32.mrf.mxu0
    %v1015 = vadd.f32 0.0, %v1014
    %1016 = vdwg.mxu0
    %1017 = vrot.lane.b32.xlu0 %v911, 96
    %v1018 = vpop.permute.xlu0 %1017
    %v1021 = vsel %vm255, %v990, 0
    %1023 = vmatpush.msra.mxu0 0.0
    %1024 = vmatpush.msra.mxu0 0.0
    %1025 = vmatpush.msra.mxu0 0.0
    %1026 = vmatpush.msra.mxu0 0.0
    %1027 = vmatpush.msra.mxu0 0.0
    %1028 = vmatpush.msra.mxu0 0.0
    %1029 = vmatpush.msra.mxu0 0.0
    %1030 = vmatpush.msra.mxu0 0.0
    %1031 = vmatpush.msra.mxu0 0.0
    %1032 = vmatpush.msra.mxu0 0.0
    %1033 = vmatpush.msra.mxu0 0.0
    %1034 = vmatpush.msra.mxu0 0.0
    %1035 = vmatpush.msra.mxu0 0.0
    %1036 = vmatpush.msra.mxu0 0.0
    %1037 = vmatpush.msra.mxu0 0.0
    %1038 = vmatpush.msra.mxu0 %v1018
    %1039 = vmatmul.f32.gmra.mxu0 %v1021
    %v1040 = vpop.f32.mrf.mxu0
    %v1041 = vadd.f32 0.0, %v1040
    %1042 = vdwg.mxu0
    %v1043 = vld [vmem:[%s55] sm:$0xff]
    %v1044 = vld [vmem:[%s55 + $0x8] sm:$0xff]
    %v1045 = vld [vmem:[%s55 + $0x10] sm:$0xff]
    %v1046 = vld [vmem:[%s55 + $0x18] sm:$0xff]
    %v1047 = vld [vmem:[%s57] sm:$0x1]
    %v1049 = vperm.slane %v1047, 0
    %v1052 = vsel %vm165, %v1015, 0
    %v1055 = vsel %vm165, %v1041, 0
    %1057 = vmatpush.msra.mxu0 0.0
    %1058 = vmatpush.msra.mxu0 0.0
    %1059 = vmatpush.msra.mxu0 0.0
    %1060 = vmatpush.msra.mxu0 0.0
    %1061 = vmatpush.msra.mxu0 0.0
    %1062 = vmatpush.msra.mxu0 0.0
    %1063 = vmatpush.msra.mxu0 0.0
    %1064 = vmatpush.msra.mxu0 0.0
    %1065 = vmatpush.msra.mxu0 0.0
    %1066 = vmatpush.msra.mxu0 0.0
    %1067 = vmatpush.msra.mxu0 0.0
    %1068 = vmatpush.msra.mxu0 0.0
    %1069 = vmatpush.msra.mxu0 %v1046
    %1070 = vmatpush.msra.mxu0 %v1045
    %1071 = vmatpush.msra.mxu0 %v1044
    %1072 = vmatpush.msra.mxu0 %v1043
    %1073 = vmatmul.f32.gmra.mxu0 %v1052
    %v1074 = vpop.f32.mrf.mxu0
    %v1075 = vadd.f32 %v1049, %v1074
    %1076 = vmatmul.f32.gmra.mxu0 %v1055
    %v1077 = vpop.f32.mrf.mxu0
    %v1078 = vadd.f32 %v1049, %v1077
    %1079 = vdwg.mxu0
    %v1080 = vadd.f32 %v837, %v1075
    %v1081 = vadd.f32 %v838, %v1078
    %v1082 = vld [vmem:[%s59] sm:$0x1]
    %v1083 = vld [vmem:[%s61] sm:$0x1]
    %v1084 = vsel %vm165, %v1080, 0.0
    %1085 = vadd.xlane.f32.xlu0 %v1084
    %v1086 = vpop.xlane.xlu0 %1085
    %v1087 = vsel %vm165, %v1081, 0.0
    %1088 = vadd.xlane.f32.xlu0 %v1087
    %v1089 = vpop.xlane.xlu0 %1088
    %v1090 = vmul.f32 %v1086, %v383
    %v1091 = vmul.f32 %v1089, %v383
    %v1092 = vsub.f32 %v1080, %v1090
    %v1093 = vsub.f32 %v1081, %v1091
    %v1094 = vmul.f32 %v1092, %v1092
    %v1095 = vmul.f32 %v1093, %v1093
    %v1096 = vsel %vm165, %v1094, 0.0
    %1097 = vadd.xlane.f32.xlu0 %v1096
    %v1098 = vpop.xlane.xlu0 %1097
    %v1099 = vsel %vm165, %v1095, 0.0
    %1100 = vadd.xlane.f32.xlu0 %v1099
    %v1101 = vpop.xlane.xlu0 %1100
    %v1102 = vmul.f32 %v1098, %v383
    %v1103 = vmul.f32 %v1101, %v383
    %v1104 = vadd.f32 %v1102, 1e-06
    %v1105 = vadd.f32 %v1103, 1e-06
    %v1106 = vrsqrt.pop %v1104
    %v1107 = vmul.f32 %v1106, %v1104
    %v1108 = vmul.f32 %v1107, %v1106
    %v1109 = vmul.f32 0.5, %v1108
    %v1110 = vsub.f32 1.5, %v1109
    %v1111 = vmul.f32 %v1106, %v1110
    %vm1112 = vweird.f32 %v1104
    %vm1113 = vweird.f32 %v1106
    %vm1114 = vmor %vm1112, %vm1113
    %v1115 = vsel %vm1114, %v1106, %v1111
    %v1116 = vrsqrt.pop %v1105
    %v1117 = vmul.f32 %v1116, %v1105
    %v1118 = vmul.f32 %v1117, %v1116
    %v1119 = vmul.f32 0.5, %v1118
    %v1120 = vsub.f32 1.5, %v1119
    %v1121 = vmul.f32 %v1116, %v1120
    %vm1122 = vweird.f32 %v1105
    %vm1123 = vweird.f32 %v1116
    %vm1124 = vmor %vm1122, %vm1123
    %v1125 = vsel %vm1124, %v1116, %v1121
    %v1126 = vmul.f32 %v1092, %v1115
    %v1127 = vmul.f32 %v1093, %v1125
    %v1129 = vperm.slane %v1082, 0
    %v1131 = vmul.f32 %v1126, %v1129
    %v1132 = vmul.f32 %v1127, %v1129
    %v1134 = vperm.slane %v1083, 0
    %v1136 = vadd.f32 %v1131, %v1134
    %v1137 = vadd.f32 %v1132, %v1134
    %v1138 = vld [vmem:[%s63] sm:$0xff]
    %v1139 = vld [vmem:[%s63 + $0x8] sm:$0xff]
    %v1140 = vld [vmem:[%s63 + $0x10] sm:$0xff]
    %v1141 = vld [vmem:[%s63 + $0x18] sm:$0xff]
    %v1142 = vld [vmem:[%s65] sm:$0x1]
    %v1144 = vperm.slane %v1142, 0
    %v1147 = vsel %vm165, %v1136, 0
    %v1150 = vsel %vm165, %v1137, 0
    %1152 = vmatpush.msra.mxu0 0.0
    %1153 = vmatpush.msra.mxu0 0.0
    %1154 = vmatpush.msra.mxu0 0.0
    %1155 = vmatpush.msra.mxu0 0.0
    %1156 = vmatpush.msra.mxu0 0.0
    %1157 = vmatpush.msra.mxu0 0.0
    %1158 = vmatpush.msra.mxu0 0.0
    %1159 = vmatpush.msra.mxu0 0.0
    %1160 = vmatpush.msra.mxu0 0.0
    %1161 = vmatpush.msra.mxu0 0.0
    %1162 = vmatpush.msra.mxu0 0.0
    %1163 = vmatpush.msra.mxu0 0.0
    %1164 = vmatpush.msra.mxu0 %v1141
    %1165 = vmatpush.msra.mxu0 %v1140
    %1166 = vmatpush.msra.mxu0 %v1139
    %1167 = vmatpush.msra.mxu0 %v1138
    %1168 = vmatmul.f32.gmra.mxu0 %v1147
    %v1169 = vpop.f32.mrf.mxu0
    %v1170 = vadd.f32 %v1144, %v1169
    %1171 = vmatmul.f32.gmra.mxu0 %v1150
    %v1172 = vpop.f32.mrf.mxu0
    %v1173 = vadd.f32 %v1144, %v1172
    %1174 = vdwg.mxu0
    %v1175 = vmax.f32 %v1170, 0.0
    %v1176 = vmax.f32 %v1173, 0.0
    %v1177 = vld [vmem:[%s67] sm:$0xff]
    %v1178 = vld [vmem:[%s67 + $0x8] sm:$0xff]
    %v1179 = vld [vmem:[%s67 + $0x10] sm:$0xff]
    %v1180 = vld [vmem:[%s67 + $0x18] sm:$0xff]
    %v1181 = vld [vmem:[%s67 + $0x20] sm:$0xff]
    %v1182 = vld [vmem:[%s67 + $0x28] sm:$0xff]
    %v1183 = vld [vmem:[%s67 + $0x30] sm:$0xff]
    %v1184 = vld [vmem:[%s67 + $0x38] sm:$0xff]
    %v1185 = vld [vmem:[%s69] sm:$0x1]
    %v1187 = vperm.slane %v1185, 0
    %v1190 = vsel %vm483, %v1175, 0
    %v1193 = vsel %vm483, %v1176, 0
    %1195 = vmatpush.msra.mxu0 0.0
    %1196 = vmatpush.msra.mxu0 0.0
    %1197 = vmatpush.msra.mxu0 0.0
    %1198 = vmatpush.msra.mxu0 0.0
    %1199 = vmatpush.msra.mxu0 0.0
    %1200 = vmatpush.msra.mxu0 0.0
    %1201 = vmatpush.msra.mxu0 0.0
    %1202 = vmatpush.msra.mxu0 0.0
    %1203 = vmatpush.msra.mxu0 %v1184
    %1204 = vmatpush.msra.mxu0 %v1183
    %1205 = vmatpush.msra.mxu0 %v1182
    %1206 = vmatpush.msra.mxu0 %v1181
    %1207 = vmatpush.msra.mxu0 %v1180
    %1208 = vmatpush.msra.mxu0 %v1179
    %1209 = vmatpush.msra.mxu0 %v1178
    %1210 = vmatpush.msra.mxu0 %v1177
    %1211 = vmatmul.f32.gmra.mxu0 %v1190
    %v1212 = vpop.f32.mrf.mxu0
    %v1213 = vadd.f32 %v1187, %v1212
    %1214 = vmatmul.f32.gmra.mxu0 %v1193
    %v1215 = vpop.f32.mrf.mxu0
    %v1216 = vadd.f32 %v1187, %v1215
    %1217 = vdwg.mxu0
    %v1218 = vadd.f32 %v1136, %v1213
    %v1219 = vadd.f32 %v1137, %v1216
    %v1220 = vld [vmem:[%s71] sm:$0x1]
    %v1221 = vld [vmem:[%s73] sm:$0x1]
    %v1222 = vsel %vm165, %v1218, 0.0
    %1223 = vadd.xlane.f32.xlu0 %v1222
    %v1224 = vpop.xlane.xlu0 %1223
    %v1225 = vsel %vm165, %v1219, 0.0
    %1226 = vadd.xlane.f32.xlu0 %v1225
    %v1227 = vpop.xlane.xlu0 %1226
    %v1228 = vmul.f32 %v1224, %v383
    %v1229 = vmul.f32 %v1227, %v383
    %v1230 = vsub.f32 %v1218, %v1228
    %v1231 = vsub.f32 %v1219, %v1229
    %v1232 = vmul.f32 %v1230, %v1230
    %v1233 = vmul.f32 %v1231, %v1231
    %v1234 = vsel %vm165, %v1232, 0.0
    %1235 = vadd.xlane.f32.xlu0 %v1234
    %v1236 = vpop.xlane.xlu0 %1235
    %v1237 = vsel %vm165, %v1233, 0.0
    %1238 = vadd.xlane.f32.xlu0 %v1237
    %v1239 = vpop.xlane.xlu0 %1238
    %v1240 = vmul.f32 %v1236, %v383
    %v1241 = vmul.f32 %v1239, %v383
    %v1242 = vadd.f32 %v1240, 1e-06
    %v1243 = vadd.f32 %v1241, 1e-06
    %v1244 = vrsqrt.pop %v1242
    %v1245 = vmul.f32 %v1244, %v1242
    %v1246 = vmul.f32 %v1245, %v1244
    %v1247 = vmul.f32 0.5, %v1246
    %v1248 = vsub.f32 1.5, %v1247
    %v1249 = vmul.f32 %v1244, %v1248
    %vm1250 = vweird.f32 %v1242
    %vm1251 = vweird.f32 %v1244
    %vm1252 = vmor %vm1250, %vm1251
    %v1253 = vsel %vm1252, %v1244, %v1249
    %v1254 = vrsqrt.pop %v1243
    %v1255 = vmul.f32 %v1254, %v1243
    %v1256 = vmul.f32 %v1255, %v1254
    %v1257 = vmul.f32 0.5, %v1256
    %v1258 = vsub.f32 1.5, %v1257
    %v1259 = vmul.f32 %v1254, %v1258
    %vm1260 = vweird.f32 %v1243
    %vm1261 = vweird.f32 %v1254
    %vm1262 = vmor %vm1260, %vm1261
    %v1263 = vsel %vm1262, %v1254, %v1259
    %v1264 = vmul.f32 %v1230, %v1253
    %v1265 = vmul.f32 %v1231, %v1263
    %v1267 = vperm.slane %v1220, 0
    %v1269 = vmul.f32 %v1264, %v1267
    %v1270 = vmul.f32 %v1265, %v1267
    %v1272 = vperm.slane %v1221, 0
    %v1274 = vadd.f32 %v1269, %v1272
    %v1275 = vadd.f32 %v1270, %v1272
    %1276 = vst.msk [vmem:[#allocation2] sm:$0xff] %vm165, %v1274
    %1277 = vst.msk [vmem:[#allocation2 + $0x8] sm:$0xff] %vm165, %v1275
    // Predicated region
    $region150: #{encode_decode_forward.1} parent=1 // pred_check
      _
    $region151: #{encode_decode_forward.1} parent=1 // pred_check_branch
      %1279 = sbr.rel (0) target = $region153
    $region152: #{encode_decode_forward.1} parent=1 // pred_region
      %1281 = vsyncadd [#allocation3], 0
      %s1282 = sshll.u32 [#allocation2], 4
      %s1283 = int_to_ptr.vmem [resolvable:$true] %s1282
      %s1284 = sshll.u32 %s75, 4
      %s1285 = int_to_ptr.hbm [resolvable:$true] %s1284
      %1290 = dma.vmem_to_hbm [thread:$0]  %s1283, 256, %s1285, [#allocation3], 128, 128, 8
    $region153: #{encode_decode_forward.1} parent=1 // pred_fallthru
      _
    // Predicated region
    $region154: #{encode_decode_forward.1} parent=1 // pred_check
      _
    $region155: #{encode_decode_forward.1} parent=1 // pred_check_branch
      %1292 = sbr.rel (0) target = $region157
    $region156: #{encode_decode_forward.1} parent=1 // pred_region
      %1294 = dma.done [#allocation3], 256
    $region157: #{encode_decode_forward.1} parent=1 // pred_fallthru
      _
    %1295 = vsyncpa [#allocation3], 1

</llo_original>
